<compile_context>
chip_gen: v5e
topology: v5e:2x2
jax: 0.10.0
libtpu: 0.0.40
codegen_flags: <defaults>
</compile_context>

<pallas_src>
import jax
import jax.numpy as jnp
import numpy as np
from jax import lax
from jax.experimental import pallas as pl
from jax.experimental.pallas import tpu as pltpu


# ---------------------------------------------------------------------------
# Pallas kernels
# ---------------------------------------------------------------------------
def split_conv_kernel(xT_ref, ba_ref, sha_ref, o_ref):
    # xT_ref : (W, Hp*Cin)        input, W-major, (h, c) packed on lanes
    # ba_ref : (Hp*Cin, 2*H*Cout) banded 15x1 and 9x1 weights, concatenated on
    #                             the output axis (BN scale folded in)
    # sha_ref: (1, 2*H*Cout)      folded BN/bias shift per output column
    # o_ref  : (W, 2*H*Cout)      [branch1 | branch4], lane-dense (128 lanes)
    y = jnp.dot(xT_ref[...], ba_ref[...], preferred_element_type=jnp.float32)
    o_ref[...] = jnp.maximum(y + sha_ref[...], 0.0)


def tail_kernel(x_ref, m_ref, b2_ref, sh2_ref, bx_ref, bbr_ref,
                shs1_ref, bs3_ref, shs3_ref, o_ref):
    # x_ref  : (H, W*Cin)             original input, H-major, (w, c) on lanes
    # m_ref  : (H, (W+14)*Cout + (W+8)*Cout)  [padded b1 | padded b4]
    # b2_ref : block-diagonal banded 1x15 / 1x9 weights -> (.., 2*W*Cout)
    # bx_ref : (3, W*Cin,   W2*Cout)  per-H-tap banded 3x3 weights (x slice)
    # bbr_ref: (3, 2*W*Cout, W2*Cout) per-H-tap banded 3x3 weights (b1|b4 slice)
    # o_ref  : (H2, W2*Cout)
    b = jnp.maximum(
        jnp.dot(m_ref[...], b2_ref[...], preferred_element_type=jnp.float32)
        + sh2_ref[...], 0.0)                                   # (H, 2*W*Cout)
    x = x_ref[...]                                             # (H, W*Cin)

    h2 = o_ref.shape[0]
    acc = jnp.zeros(o_ref.shape, jnp.float32)
    for dh in range(bx_ref.shape[0]):          # static unroll over 3 H-taps
        acc = acc + jnp.dot(x[dh:dh + h2, :], bx_ref[dh],
                            preferred_element_type=jnp.float32)
        acc = acc + jnp.dot(b[dh:dh + h2, :], bbr_ref[dh],
                            preferred_element_type=jnp.float32)
    s = jnp.maximum(acc + shs1_ref[...], 0.0)                  # sum_conv_x1
    o_ref[...] = jnp.maximum(
        jnp.dot(s, bs3_ref[...], preferred_element_type=jnp.float32)
        + shs3_ref[...], 0.0)                                  # sum_conv_x3


# ---------------------------------------------------------------------------
# Wrapper-side helpers: banded weight matrices (BN scale folded) + shifts
# ---------------------------------------------------------------------------
def _band_matrix(w_taps, scale, in_len, out_len, offset):
    """B[p*cin+ci, q*cout+co] = w_taps[p-q-offset, ci, co] * scale[co]
       for 0 <= p-q-offset < k, else 0.  (gather-based, no matmul)"""
    k, cin, cout = w_taps.shape
    ws = w_taps.astype(jnp.float32) * scale[None, None, :]     # (k, cin, cout)
    p = np.arange(in_len)[:, None]
    q = np.arange(out_len)[None, :]
    d = p - q - offset
    valid = jnp.asarray((d >= 0) & (d < k), dtype=jnp.float32)  # (in, out)
    dcl = np.clip(d, 0, k - 1)
    b = ws[dcl] * valid[:, :, None, None]          # (in, out, cin, cout)
    b = jnp.transpose(b, (0, 2, 1, 3))             # (in, cin, out, cout)
    return b.reshape(in_len * cin, out_len * cout)


def _tile_shift(shift, out_len):
    return jnp.tile(shift, out_len).reshape(1, out_len * shift.shape[0])


# ---------------------------------------------------------------------------
# RES_Block forward (Pallas path)
# ---------------------------------------------------------------------------
def res_block(x_nchw, p):
    N, Cin, H, W = x_nchw.shape
    Cout = p["c11"]["w"].shape[-1]
    H2, W2 = H - 2, W - 2
    f32 = jnp.float32

    x_nhwc = jnp.transpose(x_nchw, (0, 2, 3, 1)).astype(f32)   # NCHW -> NHWC

    # ---- kernel A: split_conv_x1_1 (15x1, pad 7) + split_conv_x4_1 (9x1, pad 4)
    ph = 7                                # pad H once by the max of (7, 4)
    Hp = H + 2 * ph
    xp = jnp.pad(x_nhwc, ((0, 0), (ph, ph), (0, 0), (0, 0)))
    xT = jnp.transpose(xp, (0, 2, 1, 3)).reshape(N, W, Hp * Cin)  # (n, w, (h,c))

    B11 = _band_matrix(p["c11"]["w"][:, 0], p["c11"]["scale"], Hp, H, 0)
    B41 = _band_matrix(p["c41"]["w"][:, 0], p["c41"]["scale"], Hp, H, ph - 4)
    BA = jnp.concatenate([B11, B41], axis=1)                   # (Hp*Cin, 2*H*Cout)
    shA = jnp.concatenate([_tile_shift(p["c11"]["shift"], H),
                           _tile_shift(p["c41"]["shift"], H)], axis=1)

    oa = pl.pallas_call(
        split_conv_kernel,
        out_shape=jax.ShapeDtypeStruct((N, W, 2 * H * Cout), f32),
        grid=(N,),
        in_specs=[
            pl.BlockSpec((None, W, Hp * Cin), lambda n: (n, 0, 0)),
            pl.BlockSpec((Hp * Cin, 2 * H * Cout), lambda n: (0, 0)),
            pl.BlockSpec((1, 2 * H * Cout), lambda n: (0, 0)),
        ],
        out_specs=pl.BlockSpec((None, W, 2 * H * Cout), lambda n: (n, 0, 0)),
        compiler_params=pltpu.CompilerParams(
            dimension_semantics=("parallel",),
            vmem_limit_bytes=32 * 1024 * 1024),
    )(xT, BA, shA)

    # ---- wrapper layout plumbing between the two kernels (tiny tensors) ----
    oa = oa.reshape(N, W, 2, H, Cout).transpose(0, 2, 3, 1, 4)  # (N, 2, H, W, C)
    m1 = jnp.pad(oa[:, 0], ((0, 0), (0, 0), (7, 7), (0, 0))
                 ).reshape(N, H, (W + 14) * Cout)
    m4 = jnp.pad(oa[:, 1], ((0, 0), (0, 0), (4, 4), (0, 0))
                 ).reshape(N, H, (W + 8) * Cout)
    m = jnp.concatenate([m1, m4], axis=-1)                      # (N, H, K1+K4)
    x_rows = x_nhwc.reshape(N, H, W * Cin)                      # (N, H, W*Cin)

    # ---- kernel B: split_conv_x1_2 + split_conv_x4_2 + sum_conv_x1 + sum_conv_x3
    K1 = (W + 14) * Cout
    K4 = (W + 8) * Cout
    B12 = _band_matrix(p["c12"]["w"][0], p["c12"]["scale"], W + 14, W, 0)
    B42 = _band_matrix(p["c42"]["w"][0], p["c42"]["scale"], W + 8, W, 0)
    B2 = jnp.zeros((K1 + K4, 2 * W * Cout), f32)
    B2 = B2.at[:K1, :W * Cout].set(B12).at[K1:, W * Cout:].set(B42)
    sh2 = jnp.concatenate([_tile_shift(p["c12"]["shift"], W),
                           _tile_shift(p["c42"]["shift"], W)], axis=1)

    ws1, ss1 = p["s1"]["w"], p["s1"]["scale"]
    Bx = jnp.stack([_band_matrix(ws1[dh][:, :Cin, :], ss1, W, W2, 0)
                    for dh in range(3)])                        # (3, W*Cin, W2*Cout)
    Bbr = jnp.stack([jnp.concatenate(
        [_band_matrix(ws1[dh][:, Cin:Cin + Cout, :], ss1, W, W2, 0),
         _band_matrix(ws1[dh][:, Cin + Cout:, :], ss1, W, W2, 0)], axis=0)
        for dh in range(3)])                                    # (3, 2*W*Cout, W2*Cout)
    shs1 = _tile_shift(p["s1"]["shift"], W2)
    Bs3 = _band_matrix(p["s3"]["w"][0], p["s3"]["scale"], W2, W2, 0)
    shs3 = _tile_shift(p["s3"]["shift"], W2)

    out = pl.pallas_call(
        tail_kernel,
        out_shape=jax.ShapeDtypeStruct((N, H2, W2 * Cout), f32),
        grid=(N,),
        in_specs=[
            pl.BlockSpec((None, H, W * Cin), lambda n: (n, 0, 0)),
            pl.BlockSpec((None, H, K1 + K4), lambda n: (n, 0, 0)),
            pl.BlockSpec((K1 + K4, 2 * W * Cout), lambda n: (0, 0)),
            pl.BlockSpec((1, 2 * W * Cout), lambda n: (0, 0)),
            pl.BlockSpec((3, W * Cin, W2 * Cout), lambda n: (0, 0, 0)),
            pl.BlockSpec((3, 2 * W * Cout, W2 * Cout), lambda n: (0, 0, 0)),
            pl.BlockSpec((1, W2 * Cout), lambda n: (0, 0)),
            pl.BlockSpec((W2 * Cout, W2 * Cout), lambda n: (0, 0)),
            pl.BlockSpec((1, W2 * Cout), lambda n: (0, 0)),
        ],
        out_specs=pl.BlockSpec((None, H2, W2 * Cout), lambda n: (n, 0, 0)),
        compiler_params=pltpu.CompilerParams(
            dimension_semantics=("parallel",),
            vmem_limit_bytes=32 * 1024 * 1024),
    )(x_rows, m, B2, sh2, Bx, Bbr, shs1, Bs3, shs3)

    out = out.reshape(N, H2, W2, Cout)                          # lane-dense -> NHWC
    return jnp.transpose(out, (0, 3, 1, 2))                     # NHWC -> NCHW


res_block_jit = jax.jit(res_block)


# ---------------------------------------------------------------------------
# Pure-JAX reference (for correctness check)
# ---------------------------------------------------------------------------
def ref_conv_bn_relu(x_nhwc, p, ph, pw):
    y = lax.conv_general_dilated(
        x_nhwc, p["w"], window_strides=(1, 1),
        padding=((ph, ph), (pw, pw)),
        dimension_numbers=("NHWC", "HWIO", "NHWC"),
        precision=lax.Precision.HIGHEST)
    return jnp.maximum(y * p["scale"] + p["shift"], 0.0)


def res_block_ref(x_nchw, p):
    x = jnp.transpose(x_nchw, (0, 2, 3, 1))
    b1 = ref_conv_bn_relu(x, p["c11"], 7, 0)
    b1 = ref_conv_bn_relu(b1, p["c12"], 0, 7)
    b4 = ref_conv_bn_relu(x, p["c41"], 4, 0)
    b4 = ref_conv_bn_relu(b4, p["c42"], 0, 4)
    cat = jnp.concatenate([x, b1, b4], axis=-1)
    s = ref_conv_bn_relu(cat, p["s1"], 0, 0)
    s = ref_conv_bn_relu(s, p["s3"], 0, 0)
    return jnp.transpose(s, (0, 3, 1, 2))


# ---------------------------------------------------------------------------
# Deterministic parameter init (conv weight/bias + folded eval-mode BN)
# ---------------------------------------------------------------------------
def init_stage(key, kh, kw, cin, cout):
    kw_, kb, kg, kbe, km, kv = jax.random.split(key, 6)
    w = jax.random.normal(kw_, (kh, kw, cin, cout), jnp.float32) / np.sqrt(kh * kw * cin)
    b = 0.1 * jax.random.normal(kb, (cout,), jnp.float32)
    gamma = 1.0 + 0.1 * jax.random.normal(kg, (cout,), jnp.float32)
    beta = 0.1 * jax.random.normal(kbe, (cout,), jnp.float32)
    mean = 0.1 * jax.random.normal(km, (cout,), jnp.float32)
    var = 1.0 + 0.1 * jax.random.uniform(kv, (cout,), jnp.float32)
    eps = 1e-5
    scale = gamma / jnp.sqrt(var + eps)
    shift = (b - mean) * scale + beta
    return {"w": w, "scale": scale, "shift": shift}


if __name__ == "__main__":
    N, Cin, Cout, H, W = 2, 4, 4, 16, 16   # in_channels == out_channels (cat requires it)

    key = jax.random.PRNGKey(0)
    kx, k1, k2, k3, k4, k5, k6 = jax.random.split(key, 7)
    x = jax.random.normal(kx, (N, Cin, H, W), jnp.float32)

    params = {
        "c11": init_stage(k1, 15, 1, Cin, Cout),
        "c12": init_stage(k2, 1, 15, Cout, Cout),
        "c41": init_stage(k3, 9, 1, Cin, Cout),
        "c42": init_stage(k4, 1, 9, Cout, Cout),
        "s1":  init_stage(k5, 3, 3, 3 * Cout, Cout),
        "s3":  init_stage(k6, 1, 1, Cout, Cout),
    }

    out = jax.block_until_ready(res_block_jit(x, params))
    assert out.shape == (N, Cout, H - 2, W - 2), out.shape

    ref = jax.block_until_ready(res_block_ref(x, params))
    np.testing.assert_allclose(np.asarray(out), np.asarray(ref), rtol=2e-3, atol=2e-3)

    print("KERNEL_OK")
</pallas_src>

<mosaic_0001>
module attributes {stable_mosaic.version = 11 : i64} {
  func.func @split_conv_kernel(%arg0: i32, %arg1: memref<1x16x120xf32, #tpu.memory_space<vmem>>, %arg2: memref<120x128xf32, #tpu.memory_space<vmem>>, %arg3: memref<1x128xf32, #tpu.memory_space<vmem>>, %arg4: memref<1x16x128xf32, #tpu.memory_space<vmem>>) attributes {dimension_semantics = [#tpu.dimension_semantics<parallel>], iteration_bounds = array<i64: 2>, scalar_prefetch = 0 : i64, scratch_operands = 0 : i64, tpu.core_type = #tpu.core_type<tc>, window_params = [{transform_indices = @transform_0, window_bounds = array<i64: 1, 16, 120>}, {pipeline_mode = #tpu.pipeline_mode<synchronous>, transform_indices = @transform_1, window_bounds = array<i64: 120, 128>}, {pipeline_mode = #tpu.pipeline_mode<synchronous>, transform_indices = @transform_2, window_bounds = array<i64: 1, 128>}, {transform_indices = @transform_3, window_bounds = array<i64: 1, 16, 128>}]} {
    %c0 = arith.constant 0 : index
    %c0_0 = arith.constant 0 : index
    %c0_1 = arith.constant 0 : index
    %0 = vector.load %arg1[%c0, %c0_0, %c0_1] : memref<1x16x120xf32, #tpu.memory_space<vmem>>, vector<1x16x120xf32>
    %1 = vector.shape_cast %0 : vector<1x16x120xf32> to vector<16x120xf32>
    %c0_2 = arith.constant 0 : index
    %c0_3 = arith.constant 0 : index
    %2 = vector.load %arg2[%c0_2, %c0_3] : memref<120x128xf32, #tpu.memory_space<vmem>>, vector<120x128xf32>
    %cst = arith.constant dense<0.000000e+00> : vector<16x128xf32>
    %3 = tpu.matmul %1, %2, %cst {dimension_numbers = #tpu.dot_dimension_numbers<[1], [0], [0], [1], [0, 0, 1, 1], [], []>} : vector<16x120xf32>, vector<120x128xf32>, vector<16x128xf32> -> vector<16x128xf32>
    %c0_4 = arith.constant 0 : index
    %c0_5 = arith.constant 0 : index
    %4 = vector.load %arg3[%c0_4, %c0_5] : memref<1x128xf32, #tpu.memory_space<vmem>>, vector<1x128xf32>
    %5 = vector.broadcast %4 : vector<1x128xf32> to vector<16x128xf32>
    %6 = arith.addf %3, %5 : vector<16x128xf32>
    %cst_6 = arith.constant 0.000000e+00 : f32
    %7 = vector.broadcast %cst_6 : f32 to vector<16x128xf32>
    %8 = arith.maximumf %6, %7 : vector<16x128xf32>
    %c0_7 = arith.constant 0 : index
    %c0_8 = arith.constant 0 : index
    %c0_9 = arith.constant 0 : index
    %9 = vector.load %arg4[%c0_7, %c0_8, %c0_9] : memref<1x16x128xf32, #tpu.memory_space<vmem>>, vector<1x16x128xf32>
    %10 = vector.shape_cast %9 : vector<1x16x128xf32> to vector<16x128xf32>
    %11 = vector.shape_cast %8 : vector<16x128xf32> to vector<1x16x128xf32>
    tpu.vector_store %arg4[%c0_7, %c0_8, %c0_9], %11 {strides = array<i32>} : memref<1x16x128xf32, #tpu.memory_space<vmem>>, vector<1x16x128xf32>,
    return
  }
  func.func @transform_0(%arg0: i32) -> (i32, i32, i32) {
    %c0_i32 = arith.constant 0 : i32
    %c0_i32_0 = arith.constant 0 : i32
    %c0_i32_1 = arith.constant 0 : i32
    return %arg0, %c0_i32, %c0_i32_0 : i32, i32, i32
  }
  func.func @transform_1(%arg0: i32) -> (i32, i32) {
    %c0_i32 = arith.constant 0 : i32
    %c0_i32_0 = arith.constant 0 : i32
    %c0_i32_1 = arith.constant 0 : i32
    return %c0_i32, %c0_i32_0 : i32, i32
  }
  func.func @transform_2(%arg0: i32) -> (i32, i32) {
    %c0_i32 = arith.constant 0 : i32
    %c0_i32_0 = arith.constant 0 : i32
    %c0_i32_1 = arith.constant 0 : i32
    return %c0_i32, %c0_i32_0 : i32, i32
  }
  func.func @transform_3(%arg0: i32) -> (i32, i32, i32) {
    %c0_i32 = arith.constant 0 : i32
    %c0_i32_0 = arith.constant 0 : i32
    %c0_i32_1 = arith.constant 0 : i32
    return %arg0, %c0_i32, %c0_i32_0 : i32, i32, i32
  }
}

module attributes {stable_mosaic.version = 11 : i64} {
  func.func @tail_kernel(%arg0: i32, %arg1: memref<1x16x64xf32, #tpu.memory_space<vmem>>, %arg2: memref<1x16x216xf32, #tpu.memory_space<vmem>>, %arg3: memref<216x128xf32, #tpu.memory_space<vmem>>, %arg4: memref<1x128xf32, #tpu.memory_space<vmem>>, %arg5: memref<3x64x56xf32, #tpu.memory_space<vmem>>, %arg6: memref<3x128x56xf32, #tpu.memory_space<vmem>>, %arg7: memref<1x56xf32, #tpu.memory_space<vmem>>, %arg8: memref<56x56xf32, #tpu.memory_space<vmem>>, %arg9: memref<1x56xf32, #tpu.memory_space<vmem>>, %arg10: memref<1x14x56xf32, #tpu.memory_space<vmem>>) attributes {dimension_semantics = [#tpu.dimension_semantics<parallel>], iteration_bounds = array<i64: 2>, scalar_prefetch = 0 : i64, scratch_operands = 0 : i64, tpu.core_type = #tpu.core_type<tc>, window_params = [{transform_indices = @transform_0, window_bounds = array<i64: 1, 16, 64>}, {transform_indices = @transform_1, window_bounds = array<i64: 1, 16, 216>}, {pipeline_mode = #tpu.pipeline_mode<synchronous>, transform_indices = @transform_2, window_bounds = array<i64: 216, 128>}, {pipeline_mode = #tpu.pipeline_mode<synchronous>, transform_indices = @transform_3, window_bounds = array<i64: 1, 128>}, {pipeline_mode = #tpu.pipeline_mode<synchronous>, transform_indices = @transform_4, window_bounds = array<i64: 3, 64, 56>}, {pipeline_mode = #tpu.pipeline_mode<synchronous>, transform_indices = @transform_5, window_bounds = array<i64: 3, 128, 56>}, {pipeline_mode = #tpu.pipeline_mode<synchronous>, transform_indices = @transform_6, window_bounds = array<i64: 1, 56>}, {pipeline_mode = #tpu.pipeline_mode<synchronous>, transform_indices = @transform_7, window_bounds = array<i64: 56, 56>}, {pipeline_mode = #tpu.pipeline_mode<synchronous>, transform_indices = @transform_8, window_bounds = array<i64: 1, 56>}, {transform_indices = @transform_9, window_bounds = array<i64: 1, 14, 56>}]} {
    %c0 = arith.constant 0 : index
    %c0_0 = arith.constant 0 : index
    %c0_1 = arith.constant 0 : index
    %0 = vector.load %arg2[%c0, %c0_0, %c0_1] : memref<1x16x216xf32, #tpu.memory_space<vmem>>, vector<1x16x216xf32>
    %1 = vector.shape_cast %0 : vector<1x16x216xf32> to vector<16x216xf32>
    %c0_2 = arith.constant 0 : index
    %c0_3 = arith.constant 0 : index
    %2 = vector.load %arg3[%c0_2, %c0_3] : memref<216x128xf32, #tpu.memory_space<vmem>>, vector<216x128xf32>
    %cst = arith.constant dense<0.000000e+00> : vector<16x128xf32>
    %3 = tpu.matmul %1, %2, %cst {dimension_numbers = #tpu.dot_dimension_numbers<[1], [0], [0], [1], [0, 0, 1, 1], [], []>} : vector<16x216xf32>, vector<216x128xf32>, vector<16x128xf32> -> vector<16x128xf32>
    %c0_4 = arith.constant 0 : index
    %c0_5 = arith.constant 0 : index
    %4 = vector.load %arg4[%c0_4, %c0_5] : memref<1x128xf32, #tpu.memory_space<vmem>>, vector<1x128xf32>
    %5 = vector.broadcast %4 : vector<1x128xf32> to vector<16x128xf32>
    %6 = arith.addf %3, %5 : vector<16x128xf32>
    %cst_6 = arith.constant 0.000000e+00 : f32
    %7 = vector.broadcast %cst_6 : f32 to vector<16x128xf32>
    %8 = arith.maximumf %6, %7 : vector<16x128xf32>
    %c0_7 = arith.constant 0 : index
    %c0_8 = arith.constant 0 : index
    %c0_9 = arith.constant 0 : index
    %9 = vector.load %arg1[%c0_7, %c0_8, %c0_9] : memref<1x16x64xf32, #tpu.memory_space<vmem>>, vector<1x16x64xf32>
    %10 = vector.shape_cast %9 : vector<1x16x64xf32> to vector<16x64xf32>
    %cst_10 = arith.constant 0.000000e+00 : f32
    %11 = vector.broadcast %cst_10 : f32 to vector<14x56xf32>
    %12 = vector.extract_strided_slice %10 {offsets = [0, 0], sizes = [14, 64], strides = [1, 1]} : vector<16x64xf32> to vector<14x64xf32>
    %c0_11 = arith.constant 0 : index
    %c0_12 = arith.constant 0 : index
    %c0_13 = arith.constant 0 : index
    %13 = vector.load %arg5[%c0_11, %c0_12, %c0_13] : memref<3x64x56xf32, #tpu.memory_space<vmem>>, vector<1x64x56xf32>
    %14 = vector.shape_cast %13 : vector<1x64x56xf32> to vector<64x56xf32>
    %cst_14 = arith.constant dense<0.000000e+00> : vector<14x56xf32>
    %15 = tpu.matmul %12, %14, %cst_14 {dimension_numbers = #tpu.dot_dimension_numbers<[1], [0], [0], [1], [0, 0, 1, 1], [], []>} : vector<14x64xf32>, vector<64x56xf32>, vector<14x56xf32> -> vector<14x56xf32>
    %16 = arith.addf %11, %15 : vector<14x56xf32>
    %17 = vector.extract_strided_slice %8 {offsets = [0, 0], sizes = [14, 128], strides = [1, 1]} : vector<16x128xf32> to vector<14x128xf32>
    %c0_15 = arith.constant 0 : index
    %c0_16 = arith.constant 0 : index
    %c0_17 = arith.constant 0 : index
    %18 = vector.load %arg6[%c0_15, %c0_16, %c0_17] : memref<3x128x56xf32, #tpu.memory_space<vmem>>, vector<1x128x56xf32>
    %19 = vector.shape_cast %18 : vector<1x128x56xf32> to vector<128x56xf32>
    %cst_18 = arith.constant dense<0.000000e+00> : vector<14x56xf32>
    %20 = tpu.matmul %17, %19, %cst_18 {dimension_numbers = #tpu.dot_dimension_numbers<[1], [0], [0], [1], [0, 0, 1, 1], [], []>} : vector<14x128xf32>, vector<128x56xf32>, vector<14x56xf32> -> vector<14x56xf32>
    %21 = arith.addf %16, %20 : vector<14x56xf32>
    %22 = vector.extract_strided_slice %10 {offsets = [1, 0], sizes = [14, 64], strides = [1, 1]} : vector<16x64xf32> to vector<14x64xf32>
    %c1 = arith.constant 1 : index
    %c0_19 = arith.constant 0 : index
    %c0_20 = arith.constant 0 : index
    %23 = vector.load %arg5[%c1, %c0_19, %c0_20] : memref<3x64x56xf32, #tpu.memory_space<vmem>>, vector<1x64x56xf32>
    %24 = vector.shape_cast %23 : vector<1x64x56xf32> to vector<64x56xf32>
    %cst_21 = arith.constant dense<0.000000e+00> : vector<14x56xf32>
    %25 = tpu.matmul %22, %24, %cst_21 {dimension_numbers = #tpu.dot_dimension_numbers<[1], [0], [0], [1], [0, 0, 1, 1], [], []>} : vector<14x64xf32>, vector<64x56xf32>, vector<14x56xf32> -> vector<14x56xf32>
    %26 = arith.addf %21, %25 : vector<14x56xf32>
    %27 = vector.extract_strided_slice %8 {offsets = [1, 0], sizes = [14, 128], strides = [1, 1]} : vector<16x128xf32> to vector<14x128xf32>
    %c1_22 = arith.constant 1 : index
    %c0_23 = arith.constant 0 : index
    %c0_24 = arith.constant 0 : index
    %28 = vector.load %arg6[%c1_22, %c0_23, %c0_24] : memref<3x128x56xf32, #tpu.memory_space<vmem>>, vector<1x128x56xf32>
    %29 = vector.shape_cast %28 : vector<1x128x56xf32> to vector<128x56xf32>
    %cst_25 = arith.constant dense<0.000000e+00> : vector<14x56xf32>
    %30 = tpu.matmul %27, %29, %cst_25 {dimension_numbers = #tpu.dot_dimension_numbers<[1], [0], [0], [1], [0, 0, 1, 1], [], []>} : vector<14x128xf32>, vector<128x56xf32>, vector<14x56xf32> -> vector<14x56xf32>
    %31 = arith.addf %26, %30 : vector<14x56xf32>
    %32 = vector.extract_strided_slice %10 {offsets = [2, 0], sizes = [14, 64], strides = [1, 1]} : vector<16x64xf32> to vector<14x64xf32>
    %c2 = arith.constant 2 : index
    %c0_26 = arith.constant 0 : index
    %c0_27 = arith.constant 0 : index
    %33 = vector.load %arg5[%c2, %c0_26, %c0_27] : memref<3x64x56xf32, #tpu.memory_space<vmem>>, vector<1x64x56xf32>
    %34 = vector.shape_cast %33 : vector<1x64x56xf32> to vector<64x56xf32>
    %cst_28 = arith.constant dense<0.000000e+00> : vector<14x56xf32>
    %35 = tpu.matmul %32, %34, %cst_28 {dimension_numbers = #tpu.dot_dimension_numbers<[1], [0], [0], [1], [0, 0, 1, 1], [], []>} : vector<14x64xf32>, vector<64x56xf32>, vector<14x56xf32> -> vector<14x56xf32>
    %36 = arith.addf %31, %35 : vector<14x56xf32>
    %37 = vector.extract_strided_slice %8 {offsets = [2, 0], sizes = [14, 128], strides = [1, 1]} : vector<16x128xf32> to vector<14x128xf32>
    %c2_29 = arith.constant 2 : index
    %c0_30 = arith.constant 0 : index
    %c0_31 = arith.constant 0 : index
    %38 = vector.load %arg6[%c2_29, %c0_30, %c0_31] : memref<3x128x56xf32, #tpu.memory_space<vmem>>, vector<1x128x56xf32>
    %39 = vector.shape_cast %38 : vector<1x128x56xf32> to vector<128x56xf32>
    %cst_32 = arith.constant dense<0.000000e+00> : vector<14x56xf32>
    %40 = tpu.matmul %37, %39, %cst_32 {dimension_numbers = #tpu.dot_dimension_numbers<[1], [0], [0], [1], [0, 0, 1, 1], [], []>} : vector<14x128xf32>, vector<128x56xf32>, vector<14x56xf32> -> vector<14x56xf32>
    %41 = arith.addf %36, %40 : vector<14x56xf32>
    %c0_33 = arith.constant 0 : index
    %c0_34 = arith.constant 0 : index
    %42 = vector.load %arg7[%c0_33, %c0_34] : memref<1x56xf32, #tpu.memory_space<vmem>>, vector<1x56xf32>
    %43 = vector.broadcast %42 : vector<1x56xf32> to vector<14x56xf32>
    %44 = arith.addf %41, %43 : vector<14x56xf32>
    %cst_35 = arith.constant 0.000000e+00 : f32
    %45 = vector.broadcast %cst_35 : f32 to vector<14x56xf32>
    %46 = arith.maximumf %44, %45 : vector<14x56xf32>
    %c0_36 = arith.constant 0 : index
    %c0_37 = arith.constant 0 : index
    %47 = vector.load %arg8[%c0_36, %c0_37] : memref<56x56xf32, #tpu.memory_space<vmem>>, vector<56x56xf32>
    %cst_38 = arith.constant dense<0.000000e+00> : vector<14x56xf32>
    %48 = tpu.matmul %46, %47, %cst_38 {dimension_numbers = #tpu.dot_dimension_numbers<[1], [0], [0], [1], [0, 0, 1, 1], [], []>} : vector<14x56xf32>, vector<56x56xf32>, vector<14x56xf32> -> vector<14x56xf32>
    %c0_39 = arith.constant 0 : index
    %c0_40 = arith.constant 0 : index
    %49 = vector.load %arg9[%c0_39, %c0_40] : memref<1x56xf32, #tpu.memory_space<vmem>>, vector<1x56xf32>
    %50 = vector.broadcast %49 : vector<1x56xf32> to vector<14x56xf32>
    %51 = arith.addf %48, %50 : vector<14x56xf32>
    %cst_41 = arith.constant 0.000000e+00 : f32
    %52 = vector.broadcast %cst_41 : f32 to vector<14x56xf32>
    %53 = arith.maximumf %51, %52 : vector<14x56xf32>
    %c0_42 = arith.constant 0 : index
    %c0_43 = arith.constant 0 : index
    %c0_44 = arith.constant 0 : index
    %54 = vector.load %arg10[%c0_42, %c0_43, %c0_44] : memref<1x14x56xf32, #tpu.memory_space<vmem>>, vector<1x14x56xf32>
    %55 = vector.shape_cast %54 : vector<1x14x56xf32> to vector<14x56xf32>
    %56 = vector.shape_cast %53 : vector<14x56xf32> to vector<1x14x56xf32>
    tpu.vector_store %arg10[%c0_42, %c0_43, %c0_44], %56 {strides = array<i32>} : memref<1x14x56xf32, #tpu.memory_space<vmem>>, vector<1x14x56xf32>,
    return
  }
  func.func @transform_0(%arg0: i32) -> (i32, i32, i32) {
    %c0_i32 = arith.constant 0 : i32
    %c0_i32_0 = arith.constant 0 : i32
    %c0_i32_1 = arith.constant 0 : i32
    return %arg0, %c0_i32, %c0_i32_0 : i32, i32, i32
  }
  func.func @transform_1(%arg0: i32) -> (i32, i32, i32) {
    %c0_i32 = arith.constant 0 : i32
    %c0_i32_0 = arith.constant 0 : i32
    %c0_i32_1 = arith.constant 0 : i32
    return %arg0, %c0_i32, %c0_i32_0 : i32, i32, i32
  }
  func.func @transform_2(%arg0: i32) -> (i32, i32) {
    %c0_i32 = arith.constant 0 : i32
    %c0_i32_0 = arith.constant 0 : i32
    %c0_i32_1 = arith.constant 0 : i32
    return %c0_i32, %c0_i32_0 : i32, i32
  }
  func.func @transform_3(%arg0: i32) -> (i32, i32) {
    %c0_i32 = arith.constant 0 : i32
    %c0_i32_0 = arith.constant 0 : i32
    %c0_i32_1 = arith.constant 0 : i32
    return %c0_i32, %c0_i32_0 : i32, i32
  }
  func.func @transform_4(%arg0: i32) -> (i32, i32, i32) {
    %c0_i32 = arith.constant 0 : i32
    %c0_i32_0 = arith.constant 0 : i32
    %c0_i32_1 = arith.constant 0 : i32
    %c0_i32_2 = arith.constant 0 : i32
    return %c0_i32, %c0_i32_0, %c0_i32_1 : i32, i32, i32
  }
  func.func @transform_5(%arg0: i32) -> (i32, i32, i32) {
    %c0_i32 = arith.constant 0 : i32
    %c0_i32_0 = arith.constant 0 : i32
    %c0_i32_1 = arith.constant 0 : i32
    %c0_i32_2 = arith.constant 0 : i32
    return %c0_i32, %c0_i32_0, %c0_i32_1 : i32, i32, i32
  }
  func.func @transform_6(%arg0: i32) -> (i32, i32) {
    %c0_i32 = arith.constant 0 : i32
    %c0_i32_0 = arith.constant 0 : i32
    %c0_i32_1 = arith.constant 0 : i32
    return %c0_i32, %c0_i32_0 : i32, i32
  }
  func.func @transform_7(%arg0: i32) -> (i32, i32) {
    %c0_i32 = arith.constant 0 : i32
    %c0_i32_0 = arith.constant 0 : i32
    %c0_i32_1 = arith.constant 0 : i32
    return %c0_i32, %c0_i32_0 : i32, i32
  }
  func.func @transform_8(%arg0: i32) -> (i32, i32) {
    %c0_i32 = arith.constant 0 : i32
    %c0_i32_0 = arith.constant 0 : i32
    %c0_i32_1 = arith.constant 0 : i32
    return %c0_i32, %c0_i32_0 : i32, i32
  }
  func.func @transform_9(%arg0: i32) -> (i32, i32, i32) {
    %c0_i32 = arith.constant 0 : i32
    %c0_i32_0 = arith.constant 0 : i32
    %c0_i32_1 = arith.constant 0 : i32
    return %arg0, %c0_i32, %c0_i32_0 : i32, i32, i32
  }
}

</mosaic_0001>

<llo_original>
// kernel: tile.33
$region0: #{tile.33}
  #allocation0 [shape = 's32[1]{0}', space=sflag, size = 0x4, scoped, tag = 'scoped memory for tile.33']
  %s0 = inlined_call_operand.vmem [shape: f32[4], index: 0, kind: input, shape index: {}]
  %s1 = inlined_call_operand.vmem [shape: f32[16,4], index: 1, kind: output, shape index: {}]
  // Predicated region
  $region2: #{tile.33} parent=0 // pred_check
    _
  $region3: #{tile.33} parent=0 // pred_check_branch
    %3 = sbr.rel (0) target = $region5
  $region4: #{tile.33} parent=0 // pred_region
    _
  $region5: #{tile.33} parent=0 // pred_fallthru
    _
  %v4 = vld [vmem:[%s0] ss:$0 sm:$0xff]
  %5 = vst [vmem:[%s1] sm:$0xff] %v4
  %s6 = scalar_lea.vmem %s1, 8
  %7 = vst [vmem:[%s6] sm:$0xff] %v4

// kernel: tile.34
$region0: #{tile.34}
  %s0 = inlined_call_operand.vmem [shape: f32[16,4], index: 0, kind: input, shape index: {}]
  %s1 = inlined_call_operand.vmem [shape: f32[1,64], index: 1, kind: output, shape index: {}]
  $region1: #{tile.34} parent=0
    #allocation0 [shape = 'u8[4096]{0}', space=vmem, size = 0x1000, scoped, tag = 'scoped mem for output reshape']
    %v2 = vld [vmem:[%s0] sm:$0x1]
    %vm3 = vcmask 31744
    %4 = vst.msk [vmem:[#allocation0] sm:$0x1] %vm3, %v2
    %s5 = scalar_lea.vmem %s0, 15
    %v6 = vld [vmem:[%s5] sm:$0x1]
    %7 = vrot.lane.b32.xlu0 %v6, 60
    %v8 = vpop.permute.xlu0 %7
    %vm9 = vcmask 523744
    %10 = vst.msk [vmem:[#allocation0] sm:$0x1] %vm9, %v8
    %s11 = scalar_lea.vmem %s0, 14
    %v12 = vld [vmem:[%s11] sm:$0x1]
    %13 = vrot.lane.b32.xlu0 %v12, 56
    %v14 = vpop.permute.xlu0 %13
    %vm15 = vcmask 490944
    %16 = vst.msk [vmem:[#allocation0] sm:$0x1] %vm15, %v14
    %s17 = scalar_lea.vmem %s0, 13
    %v18 = vld [vmem:[%s17] sm:$0x1]
    %19 = vrot.lane.b32.xlu0 %v18, 52
    %v20 = vpop.permute.xlu0 %19
    %vm21 = vcmask 458144
    %22 = vst.msk [vmem:[#allocation0] sm:$0x1] %vm21, %v20
    %s23 = scalar_lea.vmem %s0, 12
    %v24 = vld [vmem:[%s23] sm:$0x1]
    %25 = vrot.lane.b32.xlu0 %v24, 48
    %v26 = vpop.permute.xlu0 %25
    %vm27 = vcmask 425344
    %28 = vst.msk [vmem:[#allocation0] sm:$0x1] %vm27, %v26
    %s29 = scalar_lea.vmem %s0, 11
    %v30 = vld [vmem:[%s29] sm:$0x1]
    %31 = vrot.lane.b32.xlu0 %v30, 44
    %v32 = vpop.permute.xlu0 %31
    %vm33 = vcmask 392544
    %34 = vst.msk [vmem:[#allocation0] sm:$0x1] %vm33, %v32
    %s35 = scalar_lea.vmem %s0, 10
    %v36 = vld [vmem:[%s35] sm:$0x1]
    %37 = vrot.lane.b32.xlu0 %v36, 40
    %v38 = vpop.permute.xlu0 %37
    %vm39 = vcmask 359744
    %40 = vst.msk [vmem:[#allocation0] sm:$0x1] %vm39, %v38
    %s41 = scalar_lea.vmem %s0, 9
    %v42 = vld [vmem:[%s41] sm:$0x1]
    %43 = vrot.lane.b32.xlu0 %v42, 36
    %v44 = vpop.permute.xlu0 %43
    %vm45 = vcmask 326944
    %46 = vst.msk [vmem:[#allocation0] sm:$0x1] %vm45, %v44
    %s47 = scalar_lea.vmem %s0, 8
    %v48 = vld [vmem:[%s47] sm:$0x1]
    %49 = vrot.lane.b32.xlu0 %v48, 32
    %v50 = vpop.permute.xlu0 %49
    %vm51 = vcmask 294144
    %52 = vst.msk [vmem:[#allocation0] sm:$0x1] %vm51, %v50
    %s53 = scalar_lea.vmem %s0, 7
    %v54 = vld [vmem:[%s53] sm:$0x1]
    %55 = vrot.lane.b32.xlu0 %v54, 28
    %v56 = vpop.permute.xlu0 %55
    %vm57 = vcmask 261344
    %58 = vst.msk [vmem:[#allocation0] sm:$0x1] %vm57, %v56
    %s59 = scalar_lea.vmem %s0, 6
    %v60 = vld [vmem:[%s59] sm:$0x1]
    %61 = vrot.lane.b32.xlu0 %v60, 24
    %v62 = vpop.permute.xlu0 %61
    %vm63 = vcmask 228544
    %64 = vst.msk [vmem:[#allocation0] sm:$0x1] %vm63, %v62
    %s65 = scalar_lea.vmem %s0, 5
    %v66 = vld [vmem:[%s65] sm:$0x1]
    %67 = vrot.lane.b32.xlu0 %v66, 20
    %v68 = vpop.permute.xlu0 %67
    %vm69 = vcmask 195744
    %70 = vst.msk [vmem:[#allocation0] sm:$0x1] %vm69, %v68
    %s71 = scalar_lea.vmem %s0, 4
    %v72 = vld [vmem:[%s71] sm:$0x1]
    %73 = vrot.lane.b32.xlu0 %v72, 16
    %v74 = vpop.permute.xlu0 %73
    %vm75 = vcmask 162944
    %76 = vst.msk [vmem:[#allocation0] sm:$0x1] %vm75, %v74
    %s77 = scalar_lea.vmem %s0, 3
    %v78 = vld [vmem:[%s77] sm:$0x1]
    %79 = vrot.lane.b32.xlu0 %v78, 12
    %v80 = vpop.permute.xlu0 %79
    %vm81 = vcmask 130144
    %82 = vst.msk [vmem:[#allocation0] sm:$0x1] %vm81, %v80
    %s83 = scalar_lea.vmem %s0, 2
    %v84 = vld [vmem:[%s83] sm:$0x1]
    %85 = vrot.lane.b32.xlu0 %v84, 8
    %v86 = vpop.permute.xlu0 %85
    %vm87 = vcmask 97344
    %88 = vst.msk [vmem:[#allocation0] sm:$0x1] %vm87, %v86
    %s89 = scalar_lea.vmem %s0, 1
    %v90 = vld [vmem:[%s89] sm:$0x1]
    %91 = vrot.lane.b32.xlu0 %v90, 4
    %v92 = vpop.permute.xlu0 %91
    %vm93 = vcmask 64544
    %94 = vst.msk [vmem:[#allocation0] sm:$0x1] %vm93, %v92
    %s96 = ssub.s32 2, 1
    %v97 = vld [vmem:[#allocation0] sm:%s96]
    %s99 = ssub.s32 2, 1
    %100 = vst [vmem:[%s1] sm:%s99] %v97

// kernel: res_block.2
$region0: #{res_block.2}
  #allocation0 [shape = 'u32[]', space=smem, size = 0x4, offset = 0x4, fixed_abs, tag = 'smem constant byte address 0x4 - core index']
  #allocation1 [shape = 'u32[72,128]{1,0:T(1,128)}', space=vmem, size = 0x9000, scoped, tag = 'internal scratch']
  %s0 = inlined_call_operand.vmem [shape: f32[2,16,120], index: 0, kind: input, shape index: {}]
  %s1 = inlined_call_operand.vmem [shape: f32[120,128], index: 1, kind: input, shape index: {}]
  %s2 = inlined_call_operand.vmem [shape: f32[1,128], index: 2, kind: input, shape index: {}]
  %s3 = inlined_call_operand.vmem [shape: f32[2,16,128], index: 3, kind: output, shape index: {}]
  %s4 = sld [smem:[#allocation0]]
  $region45: #{res_block.2} parent=0
    _
  %s6 = ssub.s32 1, %s4
  %s7 = scalar_select 0, %s6, %s4
  loop: start=0, step=1, limit=4
  $region2: #{res_block.2} parent=0 // loop_pre_header
    _
  $region3: #{res_block.2} parent=0 // loop_header
    %s9 = sphi 0, %s13
    %p10 = scmp.ge.s32.totalorder %s9, 4
    %s19 = sphi 0, %s21
    %s22 = sphi 0, %s19
    %s23 = sphi 0, %s22
    %s39 = sphi 0, %s23
    %s43 = sphi 0, %s43
    %s45 = sphi 0, %s43
    %s46 = sphi 0, %s45
    %s60 = sphi 0, %s46
    %s64 = sphi 0, %s64
    %s66 = sphi 0, %s64
    %s67 = sphi 0, %s66
    %s81 = sphi 0, %s67
    %s87 = sphi 0, %s89
    %s90 = sphi 0, %s87
    %s91 = sphi 0, %s90
    %s107 = sphi 0, %s91
  $region4: #{res_block.2} parent=0 // loop_header_branch
    %12 = sbr.rel (%p10) target = $region8
  $region5: #{res_block.2} parent=0 // loop_body
    %s14 = ssub.s32 %s9, 1
    %s15 = ssub.s32 %s9, 2
    %s16 = sadd.s32 %s9, 1
    %s17 = ssub.s32 %s9, %s16
    %p18 = scmp.eq.s32.totalorder %s17, 0
    %s20 = sadd.s32 %s19, 1
    %s21 = scalar_select %p18, %s19, %s20
    %p24 = pneg %p18
    %p25 = scmp.eq.s32.totalorder %s9, 1
    %p26 = por %p24, %p25
    %p27 = scmp.ne.s32.totalorder %s19, %s22
    %p28 = scmp.eq.s32.totalorder %s9, 0
    %p29 = por %p27, %p28
    %p30 = scmp.ne.s32.totalorder %s19, %s22
    %p31 = scmp.eq.s32.totalorder %s14, 1
    %p32 = por %p30, %p31
    %p33 = scmp.ne.s32.totalorder %s22, %s23
    %p34 = scmp.eq.s32.totalorder %s14, 0
    %p35 = por %p33, %p34
    %p36 = scmp.ne.s32.totalorder %s22, %s23
    %p37 = scmp.eq.s32.totalorder %s15, 1
    %p38 = por %p36, %p37
    %p40 = scmp.ne.s32.totalorder %s23, %s39
    %p41 = scmp.eq.s32.totalorder %s15, 0
    %p42 = por %p40, %p41
    %s44 = sadd.s32 %s43, 1
    %p47 = scmp.eq.s32.totalorder %s9, 1
    %p48 = scmp.ne.s32.totalorder %s43, %s45
    %p49 = scmp.eq.s32.totalorder %s9, 0
    %p50 = por %p48, %p49
    %p51 = scmp.ne.s32.totalorder %s43, %s45
    %p52 = scmp.eq.s32.totalorder %s14, 1
    %p53 = por %p51, %p52
    %p54 = scmp.ne.s32.totalorder %s45, %s46
    %p55 = scmp.eq.s32.totalorder %s14, 0
    %p56 = por %p54, %p55
    %p57 = scmp.ne.s32.totalorder %s45, %s46
    %p58 = scmp.eq.s32.totalorder %s15, 1
    %p59 = por %p57, %p58
    %p61 = scmp.ne.s32.totalorder %s46, %s60
    %p62 = scmp.eq.s32.totalorder %s15, 0
    %p63 = por %p61, %p62
    %s65 = sadd.s32 %s64, 1
    %p68 = scmp.eq.s32.totalorder %s9, 1
    %p69 = scmp.ne.s32.totalorder %s64, %s66
    %p70 = scmp.eq.s32.totalorder %s9, 0
    %p71 = por %p69, %p70
    %p72 = scmp.ne.s32.totalorder %s64, %s66
    %p73 = scmp.eq.s32.totalorder %s14, 1
    %p74 = por %p72, %p73
    %p75 = scmp.ne.s32.totalorder %s66, %s67
    %p76 = scmp.eq.s32.totalorder %s14, 0
    %p77 = por %p75, %p76
    %p78 = scmp.ne.s32.totalorder %s66, %s67
    %p79 = scmp.eq.s32.totalorder %s15, 1
    %p80 = por %p78, %p79
    %p82 = scmp.ne.s32.totalorder %s67, %s81
    %p83 = scmp.eq.s32.totalorder %s15, 0
    %p84 = por %p82, %p83
    %s85 = ssub.s32 %s9, %s16
    %p86 = scmp.eq.s32.totalorder %s85, 0
    %s88 = sadd.s32 %s87, 1
    %s89 = scalar_select %p86, %s87, %s88
    %p92 = pneg %p86
    %p93 = scmp.eq.s32.totalorder %s9, 1
    %p94 = por %p92, %p93
    %p95 = scmp.ne.s32.totalorder %s87, %s90
    %p96 = scmp.eq.s32.totalorder %s9, 0
    %p97 = por %p95, %p96
    %p98 = scmp.ne.s32.totalorder %s87, %s90
    %p99 = scmp.eq.s32.totalorder %s14, 1
    %p100 = por %p98, %p99
    %p101 = scmp.ne.s32.totalorder %s90, %s91
    %p102 = scmp.eq.s32.totalorder %s14, 0
    %p103 = por %p101, %p102
    %p104 = scmp.ne.s32.totalorder %s90, %s91
    %p105 = scmp.eq.s32.totalorder %s15, 1
    %p106 = por %p104, %p105
    %p108 = scmp.ne.s32.totalorder %s91, %s107
    %p109 = scmp.eq.s32.totalorder %s15, 0
    %p110 = por %p108, %p109
    %p111 = scmp.le.s32.totalorder 1, %s9
    %p112 = scmp.lt.s32.totalorder %s9, 3
    %p113 = pnand %p111, %p112
    %p114 = pneg %p113
    // Predicated region
    $region9: #{res_block.2} parent=5 // pred_check
      _
    $region10: #{res_block.2} parent=5 // pred_check_branch
      %116 = sbr.rel (%p113) target = $region12
    $region11: #{res_block.2} parent=5 // pred_region
      %s117 = ssub.s32 %s9, 1
      // Predicated region
      $region13: #{res_block.2} parent=11 // pred_check
        %p118 = pneg %p56
      $region14: #{res_block.2} parent=11 // pred_check_branch
        %120 = sbr.rel (%p118) target = $region16
      $region15: #{res_block.2} parent=11 // pred_region
        _
      $region16: #{res_block.2} parent=11 // pred_fallthru
        _
      // Predicated region
      $region17: #{res_block.2} parent=11 // pred_check
        %p121 = pneg %p77
      $region18: #{res_block.2} parent=11 // pred_check_branch
        %123 = sbr.rel (%p121) target = $region20
      $region19: #{res_block.2} parent=11 // pred_region
        _
      $region20: #{res_block.2} parent=11 // pred_fallthru
        _
    $region12: #{res_block.2} parent=5 // pred_fallthru
      _
    %p124 = scmp.lt.s32.totalorder %s9, 2
    // Predicated region
    $region21: #{res_block.2} parent=5 // pred_check
      %p125 = pneg %p124
    $region22: #{res_block.2} parent=5 // pred_check_branch
      %127 = sbr.rel (%p125) target = $region24
    $region23: #{res_block.2} parent=5 // pred_region
      // Predicated region
      $region25: #{res_block.2} parent=23 // pred_check
        %p128 = pneg %p29
      $region26: #{res_block.2} parent=23 // pred_check_branch
        %130 = sbr.rel (%p128) target = $region28
      $region27: #{res_block.2} parent=23 // pred_region
        %p131 = scmp.lt.s32.totalorder %s9, 1
        %s132 = scalar_select %p131, %s9, 1
        %s133 = smul.addr %s132, 2
        %s134 = smul.addr %s133, 8
        %s135 = scalar_lea.vmem %s0, %s134
      $region28: #{res_block.2} parent=23 // pred_fallthru
        _
    $region24: #{res_block.2} parent=5 // pred_fallthru
      _
    %p136 = scmp.le.s32.totalorder 1, %s9
    %p137 = scmp.lt.s32.totalorder %s9, 3
    %p138 = pnand %p136, %p137
    %p139 = pneg %p138
    // Predicated region
    $region29: #{res_block.2} parent=5 // pred_check
      _
    $region30: #{res_block.2} parent=5 // pred_check_branch
      %141 = sbr.rel (%p138) target = $region32
    $region31: #{res_block.2} parent=5 // pred_region
      %s142 = ssub.s32 %s9, 1
      %p143 = scmp.lt.s32.totalorder %s14, 1
      %s144 = scalar_select %p143, %s14, 1
      %s145 = smul.addr %s144, 2
      %s146 = smul.addr %s145, 8
      %s147 = scalar_lea.vmem %s0, %s146
      %p148 = pneg %p35
      %p149 = pneg %p32
      %p150 = pneg %p56
      %p151 = pneg %p53
      %p152 = pneg %p77
      %p153 = pneg %p74
      %p154 = pneg %p103
      %p155 = pneg %p100
      %p156 = scmp.lt.s32.totalorder %s14, 1
      %s157 = scalar_select %p156, %s14, 1
      %s158 = smul.addr %s157, 2
      %s159 = smul.addr %s158, 8
      %s160 = scalar_lea.vmem %s3, %s159
      %p161 = scmp.lt.s32.totalorder %s14, 1
      %s162 = scalar_select %p161, %s14, 1
      %s163 = smul.addr %s162, 2
      %s164 = smul.addr %s163, 8
      %s165 = scalar_lea.vmem %s0, %s164
      %p166 = scmp.lt.s32.totalorder %s14, 1
      %s167 = scalar_select %p166, %s14, 1
      %s168 = smul.addr %s167, 2
      %s169 = smul.addr %s168, 8
      %s170 = scalar_lea.vmem %s3, %s169
      %v171 = vld [vmem:[%s165] sm:$0xff]
      %v172 = vld [vmem:[%s165 + $0x8] sm:$0xff]
      %v173 = vld [vmem:[%s1] sm:$0xff]
      %v174 = vld [vmem:[%s1 + $0x8] sm:$0xff]
      %v175 = vld [vmem:[%s1 + $0x10] sm:$0xff]
      %v176 = vld [vmem:[%s1 + $0x18] sm:$0xff]
      %v177 = vld [vmem:[%s1 + $0x20] sm:$0xff]
      %v178 = vld [vmem:[%s1 + $0x28] sm:$0xff]
      %v179 = vld [vmem:[%s1 + $0x30] sm:$0xff]
      %v180 = vld [vmem:[%s1 + $0x38] sm:$0xff]
      %v181 = vld [vmem:[%s1 + $0x40] sm:$0xff]
      %v182 = vld [vmem:[%s1 + $0x48] sm:$0xff]
      %v183 = vld [vmem:[%s1 + $0x50] sm:$0xff]
      %v184 = vld [vmem:[%s1 + $0x58] sm:$0xff]
      %v185 = vld [vmem:[%s1 + $0x60] sm:$0xff]
      %v186 = vld [vmem:[%s1 + $0x68] sm:$0xff]
      %v187 = vld [vmem:[%s1 + $0x70] sm:$0xff]
      %v188 = vld [vmem:[%s2] sm:$0x1]
      %v190 = vperm.slane %v188, 0
      %vm192 = vcmask 982016
      %v194 = vsel %vm192, %v171, 0
      %v197 = vsel %vm192, %v172, 0
      %199 = vmatpush.msra.mxu0 0.0
      %200 = vmatpush.msra.mxu0 %v187
      %201 = vmatpush.msra.mxu0 %v186
      %202 = vmatpush.msra.mxu0 %v185
      %203 = vmatpush.msra.mxu0 %v184
      %204 = vmatpush.msra.mxu0 %v183
      %205 = vmatpush.msra.mxu0 %v182
      %206 = vmatpush.msra.mxu0 %v181
      %207 = vmatpush.msra.mxu0 %v180
      %208 = vmatpush.msra.mxu0 %v179
      %209 = vmatpush.msra.mxu0 %v178
      %210 = vmatpush.msra.mxu0 %v177
      %211 = vmatpush.msra.mxu0 %v176
      %212 = vmatpush.msra.mxu0 %v175
      %213 = vmatpush.msra.mxu0 %v174
      %214 = vmatpush.msra.mxu0 %v173
      %215 = vmatmul.f32.gmra.mxu0 %v194
      %v216 = vpop.f32.mrf.mxu0
      %v217 = vadd.f32 %v190, %v216
      %218 = vmatmul.f32.gmra.mxu0 %v197
      %v219 = vpop.f32.mrf.mxu0
      %v220 = vadd.f32 %v190, %v219
      %221 = vdwg.mxu0
      %v222 = vmax.f32 %v217, 0.0
      %v223 = vmax.f32 %v220, 0.0
      %224 = vst [vmem:[%s170] sm:$0xff] %v222
      %225 = vst [vmem:[%s170 + $0x8] sm:$0xff] %v223
      %p226 = scmp.lt.s32.totalorder %s14, 1
      %s227 = scalar_select %p226, %s14, 1
      %s228 = smul.addr %s227, 2
      %s229 = smul.addr %s228, 8
      %s230 = scalar_lea.vmem %s3, %s229
      // Predicated region
      $region33: #{res_block.2} parent=31 // pred_check
        %p231 = pneg %p100
      $region34: #{res_block.2} parent=31 // pred_check_branch
        %233 = sbr.rel (%p231) target = $region36
      $region35: #{res_block.2} parent=31 // pred_region
        _
      $region36: #{res_block.2} parent=31 // pred_fallthru
        _
    $region32: #{res_block.2} parent=5 // pred_fallthru
      _
    %p234 = scmp.le.s32.totalorder 2, %s9
    // Predicated region
    $region37: #{res_block.2} parent=5 // pred_check
      %p235 = pneg %p234
    $region38: #{res_block.2} parent=5 // pred_check_branch
      %237 = sbr.rel (%p235) target = $region40
    $region39: #{res_block.2} parent=5 // pred_region
      %s238 = ssub.s32 %s9, 2
      // Predicated region
      $region41: #{res_block.2} parent=39 // pred_check
        %p239 = pneg %p106
      $region42: #{res_block.2} parent=39 // pred_check_branch
        %241 = sbr.rel (%p239) target = $region44
      $region43: #{res_block.2} parent=39 // pred_region
        %p242 = scmp.lt.s32.totalorder %s15, 1
        %s243 = scalar_select %p242, %s15, 1
        %s244 = smul.addr %s243, 2
        %s245 = smul.addr %s244, 8
        %s246 = scalar_lea.vmem %s3, %s245
      $region44: #{res_block.2} parent=39 // pred_fallthru
        _
    $region40: #{res_block.2} parent=5 // pred_fallthru
      _
  $region6: #{res_block.2} parent=0 // loop_footer
    %s13 = sadd.s32 1, %s9
  $region7: #{res_block.2} parent=0 // loop_footer_branch
    %8 = sbr.rel target = $region3
  $region8: #{res_block.2} parent=0 // loop_exit
    _

// kernel: tile.53
$region0: #{tile.53}
  #allocation0 [shape = 's32[1]{0}', space=sflag, size = 0x4, scoped, tag = 'scoped memory for tile.53']
  %s0 = inlined_call_operand.vmem [shape: f32[4], index: 0, kind: input, shape index: {}]
  %s1 = inlined_call_operand.vmem [shape: f32[14,4], index: 1, kind: output, shape index: {}]
  // Predicated region
  $region2: #{tile.53} parent=0 // pred_check
    _
  $region3: #{tile.53} parent=0 // pred_check_branch
    %3 = sbr.rel (0) target = $region5
  $region4: #{tile.53} parent=0 // pred_region
    _
  $region5: #{tile.53} parent=0 // pred_fallthru
    _
  %v4 = vld [vmem:[%s0] ss:$0 sm:$0xff]
  %5 = vst [vmem:[%s1] sm:$0xff] %v4
  %s6 = scalar_lea.vmem %s1, 8
  %7 = vst [vmem:[%s6] sm:$0xff] %v4

// kernel: tile.54
$region0: #{tile.54}
  %s0 = inlined_call_operand.vmem [shape: f32[14,4], index: 0, kind: input, shape index: {}]
  %s1 = inlined_call_operand.vmem [shape: f32[1,56], index: 1, kind: output, shape index: {}]
  $region1: #{tile.54} parent=0
    #allocation0 [shape = 'u8[4096]{0}', space=vmem, size = 0x1000, scoped, tag = 'scoped mem for output reshape']
    %v2 = vld [vmem:[%s0] sm:$0x1]
    %vm3 = vcmask 31744
    %4 = vst.msk [vmem:[#allocation0] sm:$0x1] %vm3, %v2
    %s5 = scalar_lea.vmem %s0, 13
    %v6 = vld [vmem:[%s5] sm:$0x1]
    %7 = vrot.lane.b32.xlu0 %v6, 52
    %v8 = vpop.permute.xlu0 %7
    %vm9 = vcmask 458144
    %10 = vst.msk [vmem:[#allocation0] sm:$0x1] %vm9, %v8
    %s11 = scalar_lea.vmem %s0, 12
    %v12 = vld [vmem:[%s11] sm:$0x1]
    %13 = vrot.lane.b32.xlu0 %v12, 48
    %v14 = vpop.permute.xlu0 %13
    %vm15 = vcmask 425344
    %16 = vst.msk [vmem:[#allocation0] sm:$0x1] %vm15, %v14
    %s17 = scalar_lea.vmem %s0, 11
    %v18 = vld [vmem:[%s17] sm:$0x1]
    %19 = vrot.lane.b32.xlu0 %v18, 44
    %v20 = vpop.permute.xlu0 %19
    %vm21 = vcmask 392544
    %22 = vst.msk [vmem:[#allocation0] sm:$0x1] %vm21, %v20
    %s23 = scalar_lea.vmem %s0, 10
    %v24 = vld [vmem:[%s23] sm:$0x1]
    %25 = vrot.lane.b32.xlu0 %v24, 40
    %v26 = vpop.permute.xlu0 %25
    %vm27 = vcmask 359744
    %28 = vst.msk [vmem:[#allocation0] sm:$0x1] %vm27, %v26
    %s29 = scalar_lea.vmem %s0, 9
    %v30 = vld [vmem:[%s29] sm:$0x1]
    %31 = vrot.lane.b32.xlu0 %v30, 36
    %v32 = vpop.permute.xlu0 %31
    %vm33 = vcmask 326944
    %34 = vst.msk [vmem:[#allocation0] sm:$0x1] %vm33, %v32
    %s35 = scalar_lea.vmem %s0, 8
    %v36 = vld [vmem:[%s35] sm:$0x1]
    %37 = vrot.lane.b32.xlu0 %v36, 32
    %v38 = vpop.permute.xlu0 %37
    %vm39 = vcmask 294144
    %40 = vst.msk [vmem:[#allocation0] sm:$0x1] %vm39, %v38
    %s41 = scalar_lea.vmem %s0, 7
    %v42 = vld [vmem:[%s41] sm:$0x1]
    %43 = vrot.lane.b32.xlu0 %v42, 28
    %v44 = vpop.permute.xlu0 %43
    %vm45 = vcmask 261344
    %46 = vst.msk [vmem:[#allocation0] sm:$0x1] %vm45, %v44
    %s47 = scalar_lea.vmem %s0, 6
    %v48 = vld [vmem:[%s47] sm:$0x1]
    %49 = vrot.lane.b32.xlu0 %v48, 24
    %v50 = vpop.permute.xlu0 %49
    %vm51 = vcmask 228544
    %52 = vst.msk [vmem:[#allocation0] sm:$0x1] %vm51, %v50
    %s53 = scalar_lea.vmem %s0, 5
    %v54 = vld [vmem:[%s53] sm:$0x1]
    %55 = vrot.lane.b32.xlu0 %v54, 20
    %v56 = vpop.permute.xlu0 %55
    %vm57 = vcmask 195744
    %58 = vst.msk [vmem:[#allocation0] sm:$0x1] %vm57, %v56
    %s59 = scalar_lea.vmem %s0, 4
    %v60 = vld [vmem:[%s59] sm:$0x1]
    %61 = vrot.lane.b32.xlu0 %v60, 16
    %v62 = vpop.permute.xlu0 %61
    %vm63 = vcmask 162944
    %64 = vst.msk [vmem:[#allocation0] sm:$0x1] %vm63, %v62
    %s65 = scalar_lea.vmem %s0, 3
    %v66 = vld [vmem:[%s65] sm:$0x1]
    %67 = vrot.lane.b32.xlu0 %v66, 12
    %v68 = vpop.permute.xlu0 %67
    %vm69 = vcmask 130144
    %70 = vst.msk [vmem:[#allocation0] sm:$0x1] %vm69, %v68
    %s71 = scalar_lea.vmem %s0, 2
    %v72 = vld [vmem:[%s71] sm:$0x1]
    %73 = vrot.lane.b32.xlu0 %v72, 8
    %v74 = vpop.permute.xlu0 %73
    %vm75 = vcmask 97344
    %76 = vst.msk [vmem:[#allocation0] sm:$0x1] %vm75, %v74
    %s77 = scalar_lea.vmem %s0, 1
    %v78 = vld [vmem:[%s77] sm:$0x1]
    %79 = vrot.lane.b32.xlu0 %v78, 4
    %v80 = vpop.permute.xlu0 %79
    %vm81 = vcmask 64544
    %82 = vst.msk [vmem:[#allocation0] sm:$0x1] %vm81, %v80
    %s84 = ssub.s32 2, 1
    %v85 = vld [vmem:[#allocation0] sm:%s84]
    %s87 = ssub.s32 2, 1
    %88 = vst [vmem:[%s1] sm:%s87] %v85

// kernel: res_block.3
$region0: #{res_block.3}
  #allocation0 [shape = 'u32[]', space=smem, size = 0x4, offset = 0x4, fixed_abs, tag = 'smem constant byte address 0x4 - core index']
  #allocation1 [shape = 'u32[72,128]{1,0:T(1,128)}', space=vmem, size = 0x9000, scoped, tag = 'internal scratch']
  %s0 = inlined_call_operand.vmem [shape: f32[2,16,64], index: 0, kind: input, shape index: {}]
  %s1 = inlined_call_operand.vmem [shape: f32[2,16,216], index: 1, kind: input, shape index: {}]
  %s2 = inlined_call_operand.vmem [shape: f32[216,128], index: 2, kind: input, shape index: {}]
  %s3 = inlined_call_operand.vmem [shape: f32[1,128], index: 3, kind: input, shape index: {}]
  %s4 = inlined_call_operand.vmem [shape: f32[3,64,56], index: 4, kind: input, shape index: {}]
  %s5 = inlined_call_operand.vmem [shape: f32[3,128,56], index: 5, kind: input, shape index: {}]
  %s6 = inlined_call_operand.vmem [shape: f32[1,56], index: 6, kind: input, shape index: {}]
  %s7 = inlined_call_operand.vmem [shape: f32[56,56], index: 7, kind: input, shape index: {}]
  %s8 = inlined_call_operand.vmem [shape: f32[1,56], index: 8, kind: input, shape index: {}]
  %s9 = inlined_call_operand.vmem [shape: f32[2,14,56], index: 9, kind: output, shape index: {}]
  %s10 = sld [smem:[#allocation0]]
  $region69: #{res_block.3} parent=0
    _
  %s12 = ssub.s32 1, %s10
  %s13 = scalar_select 0, %s12, %s10
  loop: start=0, step=1, limit=4
  $region2: #{res_block.3} parent=0 // loop_pre_header
    _
  $region3: #{res_block.3} parent=0 // loop_header
    %s15 = sphi 0, %s19
    %p16 = scmp.ge.s32.totalorder %s15, 4
    %s25 = sphi 0, %s27
    %s28 = sphi 0, %s25
    %s29 = sphi 0, %s28
    %s45 = sphi 0, %s29
    %s51 = sphi 0, %s53
    %s54 = sphi 0, %s51
    %s55 = sphi 0, %s54
    %s71 = sphi 0, %s55
    %s75 = sphi 0, %s75
    %s77 = sphi 0, %s75
    %s78 = sphi 0, %s77
    %s92 = sphi 0, %s78
    %s96 = sphi 0, %s96
    %s98 = sphi 0, %s96
    %s99 = sphi 0, %s98
    %s113 = sphi 0, %s99
    %s117 = sphi 0, %s117
    %s119 = sphi 0, %s117
    %s120 = sphi 0, %s119
    %s134 = sphi 0, %s120
    %s138 = sphi 0, %s138
    %s140 = sphi 0, %s138
    %s141 = sphi 0, %s140
    %s155 = sphi 0, %s141
    %s159 = sphi 0, %s159
    %s161 = sphi 0, %s159
    %s162 = sphi 0, %s161
    %s176 = sphi 0, %s162
    %s180 = sphi 0, %s180
    %s182 = sphi 0, %s180
    %s183 = sphi 0, %s182
    %s197 = sphi 0, %s183
    %s201 = sphi 0, %s201
    %s203 = sphi 0, %s201
    %s204 = sphi 0, %s203
    %s218 = sphi 0, %s204
    %s224 = sphi 0, %s226
    %s227 = sphi 0, %s224
    %s228 = sphi 0, %s227
    %s244 = sphi 0, %s228
  $region4: #{res_block.3} parent=0 // loop_header_branch
    %18 = sbr.rel (%p16) target = $region8
  $region5: #{res_block.3} parent=0 // loop_body
    %s20 = ssub.s32 %s15, 1
    %s21 = ssub.s32 %s15, 2
    %s22 = sadd.s32 %s15, 1
    %s23 = ssub.s32 %s15, %s22
    %p24 = scmp.eq.s32.totalorder %s23, 0
    %s26 = sadd.s32 %s25, 1
    %s27 = scalar_select %p24, %s25, %s26
    %p30 = pneg %p24
    %p31 = scmp.eq.s32.totalorder %s15, 1
    %p32 = por %p30, %p31
    %p33 = scmp.ne.s32.totalorder %s25, %s28
    %p34 = scmp.eq.s32.totalorder %s15, 0
    %p35 = por %p33, %p34
    %p36 = scmp.ne.s32.totalorder %s25, %s28
    %p37 = scmp.eq.s32.totalorder %s20, 1
    %p38 = por %p36, %p37
    %p39 = scmp.ne.s32.totalorder %s28, %s29
    %p40 = scmp.eq.s32.totalorder %s20, 0
    %p41 = por %p39, %p40
    %p42 = scmp.ne.s32.totalorder %s28, %s29
    %p43 = scmp.eq.s32.totalorder %s21, 1
    %p44 = por %p42, %p43
    %p46 = scmp.ne.s32.totalorder %s29, %s45
    %p47 = scmp.eq.s32.totalorder %s21, 0
    %p48 = por %p46, %p47
    %s49 = ssub.s32 %s15, %s22
    %p50 = scmp.eq.s32.totalorder %s49, 0
    %s52 = sadd.s32 %s51, 1
    %s53 = scalar_select %p50, %s51, %s52
    %p56 = pneg %p50
    %p57 = scmp.eq.s32.totalorder %s15, 1
    %p58 = por %p56, %p57
    %p59 = scmp.ne.s32.totalorder %s51, %s54
    %p60 = scmp.eq.s32.totalorder %s15, 0
    %p61 = por %p59, %p60
    %p62 = scmp.ne.s32.totalorder %s51, %s54
    %p63 = scmp.eq.s32.totalorder %s20, 1
    %p64 = por %p62, %p63
    %p65 = scmp.ne.s32.totalorder %s54, %s55
    %p66 = scmp.eq.s32.totalorder %s20, 0
    %p67 = por %p65, %p66
    %p68 = scmp.ne.s32.totalorder %s54, %s55
    %p69 = scmp.eq.s32.totalorder %s21, 1
    %p70 = por %p68, %p69
    %p72 = scmp.ne.s32.totalorder %s55, %s71
    %p73 = scmp.eq.s32.totalorder %s21, 0
    %p74 = por %p72, %p73
    %s76 = sadd.s32 %s75, 1
    %p79 = scmp.eq.s32.totalorder %s15, 1
    %p80 = scmp.ne.s32.totalorder %s75, %s77
    %p81 = scmp.eq.s32.totalorder %s15, 0
    %p82 = por %p80, %p81
    %p83 = scmp.ne.s32.totalorder %s75, %s77
    %p84 = scmp.eq.s32.totalorder %s20, 1
    %p85 = por %p83, %p84
    %p86 = scmp.ne.s32.totalorder %s77, %s78
    %p87 = scmp.eq.s32.totalorder %s20, 0
    %p88 = por %p86, %p87
    %p89 = scmp.ne.s32.totalorder %s77, %s78
    %p90 = scmp.eq.s32.totalorder %s21, 1
    %p91 = por %p89, %p90
    %p93 = scmp.ne.s32.totalorder %s78, %s92
    %p94 = scmp.eq.s32.totalorder %s21, 0
    %p95 = por %p93, %p94
    %s97 = sadd.s32 %s96, 1
    %p100 = scmp.eq.s32.totalorder %s15, 1
    %p101 = scmp.ne.s32.totalorder %s96, %s98
    %p102 = scmp.eq.s32.totalorder %s15, 0
    %p103 = por %p101, %p102
    %p104 = scmp.ne.s32.totalorder %s96, %s98
    %p105 = scmp.eq.s32.totalorder %s20, 1
    %p106 = por %p104, %p105
    %p107 = scmp.ne.s32.totalorder %s98, %s99
    %p108 = scmp.eq.s32.totalorder %s20, 0
    %p109 = por %p107, %p108
    %p110 = scmp.ne.s32.totalorder %s98, %s99
    %p111 = scmp.eq.s32.totalorder %s21, 1
    %p112 = por %p110, %p111
    %p114 = scmp.ne.s32.totalorder %s99, %s113
    %p115 = scmp.eq.s32.totalorder %s21, 0
    %p116 = por %p114, %p115
    %s118 = sadd.s32 %s117, 1
    %p121 = scmp.eq.s32.totalorder %s15, 1
    %p122 = scmp.ne.s32.totalorder %s117, %s119
    %p123 = scmp.eq.s32.totalorder %s15, 0
    %p124 = por %p122, %p123
    %p125 = scmp.ne.s32.totalorder %s117, %s119
    %p126 = scmp.eq.s32.totalorder %s20, 1
    %p127 = por %p125, %p126
    %p128 = scmp.ne.s32.totalorder %s119, %s120
    %p129 = scmp.eq.s32.totalorder %s20, 0
    %p130 = por %p128, %p129
    %p131 = scmp.ne.s32.totalorder %s119, %s120
    %p132 = scmp.eq.s32.totalorder %s21, 1
    %p133 = por %p131, %p132
    %p135 = scmp.ne.s32.totalorder %s120, %s134
    %p136 = scmp.eq.s32.totalorder %s21, 0
    %p137 = por %p135, %p136
    %s139 = sadd.s32 %s138, 1
    %p142 = scmp.eq.s32.totalorder %s15, 1
    %p143 = scmp.ne.s32.totalorder %s138, %s140
    %p144 = scmp.eq.s32.totalorder %s15, 0
    %p145 = por %p143, %p144
    %p146 = scmp.ne.s32.totalorder %s138, %s140
    %p147 = scmp.eq.s32.totalorder %s20, 1
    %p148 = por %p146, %p147
    %p149 = scmp.ne.s32.totalorder %s140, %s141
    %p150 = scmp.eq.s32.totalorder %s20, 0
    %p151 = por %p149, %p150
    %p152 = scmp.ne.s32.totalorder %s140, %s141
    %p153 = scmp.eq.s32.totalorder %s21, 1
    %p154 = por %p152, %p153
    %p156 = scmp.ne.s32.totalorder %s141, %s155
    %p157 = scmp.eq.s32.totalorder %s21, 0
    %p158 = por %p156, %p157
    %s160 = sadd.s32 %s159, 1
    %p163 = scmp.eq.s32.totalorder %s15, 1
    %p164 = scmp.ne.s32.totalorder %s159, %s161
    %p165 = scmp.eq.s32.totalorder %s15, 0
    %p166 = por %p164, %p165
    %p167 = scmp.ne.s32.totalorder %s159, %s161
    %p168 = scmp.eq.s32.totalorder %s20, 1
    %p169 = por %p167, %p168
    %p170 = scmp.ne.s32.totalorder %s161, %s162
    %p171 = scmp.eq.s32.totalorder %s20, 0
    %p172 = por %p170, %p171
    %p173 = scmp.ne.s32.totalorder %s161, %s162
    %p174 = scmp.eq.s32.totalorder %s21, 1
    %p175 = por %p173, %p174
    %p177 = scmp.ne.s32.totalorder %s162, %s176
    %p178 = scmp.eq.s32.totalorder %s21, 0
    %p179 = por %p177, %p178
    %s181 = sadd.s32 %s180, 1
    %p184 = scmp.eq.s32.totalorder %s15, 1
    %p185 = scmp.ne.s32.totalorder %s180, %s182
    %p186 = scmp.eq.s32.totalorder %s15, 0
    %p187 = por %p185, %p186
    %p188 = scmp.ne.s32.totalorder %s180, %s182
    %p189 = scmp.eq.s32.totalorder %s20, 1
    %p190 = por %p188, %p189
    %p191 = scmp.ne.s32.totalorder %s182, %s183
    %p192 = scmp.eq.s32.totalorder %s20, 0
    %p193 = por %p191, %p192
    %p194 = scmp.ne.s32.totalorder %s182, %s183
    %p195 = scmp.eq.s32.totalorder %s21, 1
    %p196 = por %p194, %p195
    %p198 = scmp.ne.s32.totalorder %s183, %s197
    %p199 = scmp.eq.s32.totalorder %s21, 0
    %p200 = por %p198, %p199
    %s202 = sadd.s32 %s201, 1
    %p205 = scmp.eq.s32.totalorder %s15, 1
    %p206 = scmp.ne.s32.totalorder %s201, %s203
    %p207 = scmp.eq.s32.totalorder %s15, 0
    %p208 = por %p206, %p207
    %p209 = scmp.ne.s32.totalorder %s201, %s203
    %p210 = scmp.eq.s32.totalorder %s20, 1
    %p211 = por %p209, %p210
    %p212 = scmp.ne.s32.totalorder %s203, %s204
    %p213 = scmp.eq.s32.totalorder %s20, 0
    %p214 = por %p212, %p213
    %p215 = scmp.ne.s32.totalorder %s203, %s204
    %p216 = scmp.eq.s32.totalorder %s21, 1
    %p217 = por %p215, %p216
    %p219 = scmp.ne.s32.totalorder %s204, %s218
    %p220 = scmp.eq.s32.totalorder %s21, 0
    %p221 = por %p219, %p220
    %s222 = ssub.s32 %s15, %s22
    %p223 = scmp.eq.s32.totalorder %s222, 0
    %s225 = sadd.s32 %s224, 1
    %s226 = scalar_select %p223, %s224, %s225
    %p229 = pneg %p223
    %p230 = scmp.eq.s32.totalorder %s15, 1
    %p231 = por %p229, %p230
    %p232 = scmp.ne.s32.totalorder %s224, %s227
    %p233 = scmp.eq.s32.totalorder %s15, 0
    %p234 = por %p232, %p233
    %p235 = scmp.ne.s32.totalorder %s224, %s227
    %p236 = scmp.eq.s32.totalorder %s20, 1
    %p237 = por %p235, %p236
    %p238 = scmp.ne.s32.totalorder %s227, %s228
    %p239 = scmp.eq.s32.totalorder %s20, 0
    %p240 = por %p238, %p239
    %p241 = scmp.ne.s32.totalorder %s227, %s228
    %p242 = scmp.eq.s32.totalorder %s21, 1
    %p243 = por %p241, %p242
    %p245 = scmp.ne.s32.totalorder %s228, %s244
    %p246 = scmp.eq.s32.totalorder %s21, 0
    %p247 = por %p245, %p246
    %p248 = scmp.le.s32.totalorder 1, %s15
    %p249 = scmp.lt.s32.totalorder %s15, 3
    %p250 = pnand %p248, %p249
    %p251 = pneg %p250
    // Predicated region
    $region9: #{res_block.3} parent=5 // pred_check
      _
    $region10: #{res_block.3} parent=5 // pred_check_branch
      %253 = sbr.rel (%p250) target = $region12
    $region11: #{res_block.3} parent=5 // pred_region
      %s254 = ssub.s32 %s15, 1
      // Predicated region
      $region13: #{res_block.3} parent=11 // pred_check
        %p255 = pneg %p88
      $region14: #{res_block.3} parent=11 // pred_check_branch
        %257 = sbr.rel (%p255) target = $region16
      $region15: #{res_block.3} parent=11 // pred_region
        _
      $region16: #{res_block.3} parent=11 // pred_fallthru
        _
      // Predicated region
      $region17: #{res_block.3} parent=11 // pred_check
        %p258 = pneg %p109
      $region18: #{res_block.3} parent=11 // pred_check_branch
        %260 = sbr.rel (%p258) target = $region20
      $region19: #{res_block.3} parent=11 // pred_region
        _
      $region20: #{res_block.3} parent=11 // pred_fallthru
        _
      // Predicated region
      $region21: #{res_block.3} parent=11 // pred_check
        %p261 = pneg %p130
      $region22: #{res_block.3} parent=11 // pred_check_branch
        %263 = sbr.rel (%p261) target = $region24
      $region23: #{res_block.3} parent=11 // pred_region
        _
      $region24: #{res_block.3} parent=11 // pred_fallthru
        _
      // Predicated region
      $region25: #{res_block.3} parent=11 // pred_check
        %p264 = pneg %p151
      $region26: #{res_block.3} parent=11 // pred_check_branch
        %266 = sbr.rel (%p264) target = $region28
      $region27: #{res_block.3} parent=11 // pred_region
        _
      $region28: #{res_block.3} parent=11 // pred_fallthru
        _
      // Predicated region
      $region29: #{res_block.3} parent=11 // pred_check
        %p267 = pneg %p172
      $region30: #{res_block.3} parent=11 // pred_check_branch
        %269 = sbr.rel (%p267) target = $region32
      $region31: #{res_block.3} parent=11 // pred_region
        _
      $region32: #{res_block.3} parent=11 // pred_fallthru
        _
      // Predicated region
      $region33: #{res_block.3} parent=11 // pred_check
        %p270 = pneg %p193
      $region34: #{res_block.3} parent=11 // pred_check_branch
        %272 = sbr.rel (%p270) target = $region36
      $region35: #{res_block.3} parent=11 // pred_region
        _
      $region36: #{res_block.3} parent=11 // pred_fallthru
        _
      // Predicated region
      $region37: #{res_block.3} parent=11 // pred_check
        %p273 = pneg %p214
      $region38: #{res_block.3} parent=11 // pred_check_branch
        %275 = sbr.rel (%p273) target = $region40
      $region39: #{res_block.3} parent=11 // pred_region
        _
      $region40: #{res_block.3} parent=11 // pred_fallthru
        _
    $region12: #{res_block.3} parent=5 // pred_fallthru
      _
    %p276 = scmp.lt.s32.totalorder %s15, 2
    // Predicated region
    $region41: #{res_block.3} parent=5 // pred_check
      %p277 = pneg %p276
    $region42: #{res_block.3} parent=5 // pred_check_branch
      %279 = sbr.rel (%p277) target = $region44
    $region43: #{res_block.3} parent=5 // pred_region
      // Predicated region
      $region45: #{res_block.3} parent=43 // pred_check
        %p280 = pneg %p35
      $region46: #{res_block.3} parent=43 // pred_check_branch
        %282 = sbr.rel (%p280) target = $region48
      $region47: #{res_block.3} parent=43 // pred_region
        %p283 = scmp.lt.s32.totalorder %s15, 1
        %s284 = scalar_select %p283, %s15, 1
        %s285 = smul.addr %s284, 2
        %s286 = smul.addr %s285, 8
        %s287 = scalar_lea.vmem %s0, %s286
      $region48: #{res_block.3} parent=43 // pred_fallthru
        _
      // Predicated region
      $region49: #{res_block.3} parent=43 // pred_check
        %p288 = pneg %p61
      $region50: #{res_block.3} parent=43 // pred_check_branch
        %290 = sbr.rel (%p288) target = $region52
      $region51: #{res_block.3} parent=43 // pred_region
        %p291 = scmp.lt.s32.totalorder %s15, 1
        %s292 = scalar_select %p291, %s15, 1
        %s293 = smul.addr %s292, 4
        %s294 = smul.addr %s293, 8
        %s295 = scalar_lea.vmem %s1, %s294
      $region52: #{res_block.3} parent=43 // pred_fallthru
        _
    $region44: #{res_block.3} parent=5 // pred_fallthru
      _
    %p296 = scmp.le.s32.totalorder 1, %s15
    %p297 = scmp.lt.s32.totalorder %s15, 3
    %p298 = pnand %p296, %p297
    %p299 = pneg %p298
    // Predicated region
    $region53: #{res_block.3} parent=5 // pred_check
      _
    $region54: #{res_block.3} parent=5 // pred_check_branch
      %301 = sbr.rel (%p298) target = $region56
    $region55: #{res_block.3} parent=5 // pred_region
      %s302 = ssub.s32 %s15, 1
      %p303 = scmp.lt.s32.totalorder %s20, 1
      %s304 = scalar_select %p303, %s20, 1
      %s305 = smul.addr %s304, 2
      %s306 = smul.addr %s305, 8
      %s307 = scalar_lea.vmem %s0, %s306
      %p308 = pneg %p41
      %p309 = pneg %p38
      %p310 = scmp.lt.s32.totalorder %s20, 1
      %s311 = scalar_select %p310, %s20, 1
      %s312 = smul.addr %s311, 4
      %s313 = smul.addr %s312, 8
      %s314 = scalar_lea.vmem %s1, %s313
      %p315 = pneg %p67
      %p316 = pneg %p64
      %p317 = pneg %p88
      %p318 = pneg %p85
      %p319 = pneg %p109
      %p320 = pneg %p106
      %p321 = pneg %p130
      %p322 = pneg %p127
      %p323 = pneg %p151
      %p324 = pneg %p148
      %p325 = pneg %p172
      %p326 = pneg %p169
      %p327 = pneg %p193
      %p328 = pneg %p190
      %p329 = pneg %p214
      %p330 = pneg %p211
      %p331 = pneg %p240
      %p332 = pneg %p237
      %p333 = scmp.lt.s32.totalorder %s20, 1
      %s334 = scalar_select %p333, %s20, 1
      %s335 = smul.addr %s334, 2
      %s336 = smul.addr %s335, 8
      %s337 = scalar_lea.vmem %s9, %s336
      %p338 = scmp.lt.s32.totalorder %s20, 1
      %s339 = scalar_select %p338, %s20, 1
      %s340 = smul.addr %s339, 2
      %s341 = smul.addr %s340, 8
      %s342 = scalar_lea.vmem %s0, %s341
      %p343 = scmp.lt.s32.totalorder %s20, 1
      %s344 = scalar_select %p343, %s20, 1
      %s345 = smul.addr %s344, 4
      %s346 = smul.addr %s345, 8
      %s347 = scalar_lea.vmem %s1, %s346
      %p348 = scmp.lt.s32.totalorder %s20, 1
      %s349 = scalar_select %p348, %s20, 1
      %s350 = smul.addr %s349, 2
      %s351 = smul.addr %s350, 8
      %s352 = scalar_lea.vmem %s9, %s351
      %v353 = vld [vmem:[%s347] sm:$0xff]
      %v354 = vld [vmem:[%s347 + $0x8] sm:$0xff]
      %v355 = vld [vmem:[%s347 + $0x10] sm:$0xff]
      %v356 = vld [vmem:[%s347 + $0x18] sm:$0xff]
      %v357 = vld [vmem:[%s2] sm:$0xff]
      %v358 = vld [vmem:[%s2 + $0x8] sm:$0xff]
      %v359 = vld [vmem:[%s2 + $0x10] sm:$0xff]
      %v360 = vld [vmem:[%s2 + $0x18] sm:$0xff]
      %v361 = vld [vmem:[%s2 + $0x20] sm:$0xff]
      %v362 = vld [vmem:[%s2 + $0x28] sm:$0xff]
      %v363 = vld [vmem:[%s2 + $0x30] sm:$0xff]
      %v364 = vld [vmem:[%s2 + $0x38] sm:$0xff]
      %v365 = vld [vmem:[%s2 + $0x40] sm:$0xff]
      %v366 = vld [vmem:[%s2 + $0x48] sm:$0xff]
      %v367 = vld [vmem:[%s2 + $0x50] sm:$0xff]
      %v368 = vld [vmem:[%s2 + $0x58] sm:$0xff]
      %v369 = vld [vmem:[%s2 + $0x60] sm:$0xff]
      %v370 = vld [vmem:[%s2 + $0x68] sm:$0xff]
      %v371 = vld [vmem:[%s2 + $0x70] sm:$0xff]
      %v372 = vld [vmem:[%s2 + $0x78] sm:$0xff]
      %v373 = vld [vmem:[%s2 + $0x80] sm:$0xff]
      %v374 = vld [vmem:[%s2 + $0x88] sm:$0xff]
      %v375 = vld [vmem:[%s2 + $0x90] sm:$0xff]
      %v376 = vld [vmem:[%s2 + $0x98] sm:$0xff]
      %v377 = vld [vmem:[%s2 + $0xa0] sm:$0xff]
      %v378 = vld [vmem:[%s2 + $0xa8] sm:$0xff]
      %v379 = vld [vmem:[%s2 + $0xb0] sm:$0xff]
      %v380 = vld [vmem:[%s2 + $0xb8] sm:$0xff]
      %v381 = vld [vmem:[%s2 + $0xc0] sm:$0xff]
      %v382 = vld [vmem:[%s2 + $0xc8] sm:$0xff]
      %v383 = vld [vmem:[%s2 + $0xd0] sm:$0xff]
      %v384 = vld [vmem:[%s3] sm:$0x1]
      %v386 = vperm.slane %v384, 0
      %vm388 = vcmask 719872
      %v390 = vsel %vm388, %v354, 0
      %v393 = vsel %vm388, %v356, 0
      %395 = vmatpush.msra.mxu0 %v372
      %396 = vmatpush.msra.mxu0 %v371
      %397 = vmatpush.msra.mxu0 %v370
      %398 = vmatpush.msra.mxu0 %v369
      %399 = vmatpush.msra.mxu0 %v368
      %400 = vmatpush.msra.mxu0 %v367
      %401 = vmatpush.msra.mxu0 %v366
      %402 = vmatpush.msra.mxu0 %v365
      %403 = vmatpush.msra.mxu0 %v364
      %404 = vmatpush.msra.mxu0 %v363
      %405 = vmatpush.msra.mxu0 %v362
      %406 = vmatpush.msra.mxu0 %v361
      %407 = vmatpush.msra.mxu0 %v360
      %408 = vmatpush.msra.mxu0 %v359
      %409 = vmatpush.msra.mxu0 %v358
      %410 = vmatpush.msra.mxu0 %v357
      %411 = vmatmul.f32.gmra.mxu0 %v353
      %v412 = vpop.f32.mrf.mxu0
      %v413 = vadd.f32 %v386, %v412
      %414 = vmatmul.f32.gmra.mxu0 %v355
      %v415 = vpop.f32.mrf.mxu0
      %v416 = vadd.f32 %v386, %v415
      %417 = vdwg.mxu0
      %418 = vmatpush.msra.mxu0 0.0
      %419 = vmatpush.msra.mxu0 0.0
      %420 = vmatpush.msra.mxu0 0.0
      %421 = vmatpush.msra.mxu0 0.0
      %422 = vmatpush.msra.mxu0 0.0
      %423 = vmatpush.msra.mxu0 %v383
      %424 = vmatpush.msra.mxu0 %v382
      %425 = vmatpush.msra.mxu0 %v381
      %426 = vmatpush.msra.mxu0 %v380
      %427 = vmatpush.msra.mxu0 %v379
      %428 = vmatpush.msra.mxu0 %v378
      %429 = vmatpush.msra.mxu0 %v377
      %430 = vmatpush.msra.mxu0 %v376
      %431 = vmatpush.msra.mxu0 %v375
      %432 = vmatpush.msra.mxu0 %v374
      %433 = vmatpush.msra.mxu0 %v373
      %434 = vmatmul.f32.gmra.mxu0 %v390
      %v435 = vpop.f32.mrf.mxu0
      %v436 = vadd.f32 %v413, %v435
      %437 = vmatmul.f32.gmra.mxu0 %v393
      %v438 = vpop.f32.mrf.mxu0
      %v439 = vadd.f32 %v416, %v438
      %440 = vdwg.mxu0
      %v441 = vmax.f32 %v436, 0.0
      %v442 = vmax.f32 %v439, 0.0
      %v443 = vld [vmem:[%s342] sm:$0xff]
      %v444 = vld [vmem:[%s342 + $0x8] sm:$0xff]
      %v445 = vld [vmem:[%s4] sm:$0xff]
      %v446 = vld [vmem:[%s4 + $0x8] sm:$0xff]
      %v447 = vld [vmem:[%s4 + $0x10] sm:$0xff]
      %v448 = vld [vmem:[%s4 + $0x18] sm:$0xff]
      %v449 = vld [vmem:[%s4 + $0x20] sm:$0xff]
      %v450 = vld [vmem:[%s4 + $0x28] sm:$0xff]
      %v451 = vld [vmem:[%s4 + $0x30] sm:$0xff]
      %v452 = vld [vmem:[%s4 + $0x38] sm:$0xff]
      %v453 = vld [vmem:[%s5] sm:$0xff]
      %v454 = vld [vmem:[%s5 + $0x8] sm:$0xff]
      %v455 = vld [vmem:[%s5 + $0x10] sm:$0xff]
      %v456 = vld [vmem:[%s5 + $0x18] sm:$0xff]
      %v457 = vld [vmem:[%s5 + $0x20] sm:$0xff]
      %v458 = vld [vmem:[%s5 + $0x28] sm:$0xff]
      %v459 = vld [vmem:[%s5 + $0x30] sm:$0xff]
      %v460 = vld [vmem:[%s5 + $0x38] sm:$0xff]
      %v461 = vld [vmem:[%s5 + $0x40] sm:$0xff]
      %v462 = vld [vmem:[%s5 + $0x48] sm:$0xff]
      %v463 = vld [vmem:[%s5 + $0x50] sm:$0xff]
      %v464 = vld [vmem:[%s5 + $0x58] sm:$0xff]
      %v465 = vld [vmem:[%s5 + $0x60] sm:$0xff]
      %v466 = vld [vmem:[%s5 + $0x68] sm:$0xff]
      %v467 = vld [vmem:[%s5 + $0x70] sm:$0xff]
      %v468 = vld [vmem:[%s5 + $0x78] sm:$0xff]
      %469 = vmatpush.msra.mxu0 %v468
      %470 = vmatpush.msra.mxu0 %v467
      %471 = vmatpush.msra.mxu0 %v466
      %472 = vmatpush.msra.mxu0 %v465
      %473 = vmatpush.msra.mxu0 %v464
      %474 = vmatpush.msra.mxu0 %v463
      %475 = vmatpush.msra.mxu0 %v462
      %476 = vmatpush.msra.mxu0 %v461
      %477 = vmatpush.msra.mxu0 %v460
      %478 = vmatpush.msra.mxu0 %v459
      %479 = vmatpush.msra.mxu0 %v458
      %480 = vmatpush.msra.mxu0 %v457
      %481 = vmatpush.msra.mxu0 %v456
      %482 = vmatpush.msra.mxu0 %v455
      %483 = vmatpush.msra.mxu0 %v454
      %484 = vmatpush.msra.mxu0 %v453
      %485 = vmatmul.f32.gmra.mxu0 %v441
      %v486 = vpop.f32.mrf.mxu0
      %v487 = vadd.f32 0.0, %v486
      %488 = vmatmul.f32.gmra.mxu0 %v442
      %v489 = vpop.f32.mrf.mxu0
      %v490 = vadd.f32 0.0, %v489
      %491 = vdwg.mxu0
      %vm492 = vcmask 523264
      %v494 = vsel %vm492, %v443, 0
      %v497 = vsel %vm492, %v444, 0
      %499 = vmatpush.msra.mxu0 0.0
      %500 = vmatpush.msra.mxu0 0.0
      %501 = vmatpush.msra.mxu0 0.0
      %502 = vmatpush.msra.mxu0 0.0
      %503 = vmatpush.msra.mxu0 0.0
      %504 = vmatpush.msra.mxu0 0.0
      %505 = vmatpush.msra.mxu0 0.0
      %506 = vmatpush.msra.mxu0 0.0
      %507 = vmatpush.msra.mxu0 %v452
      %508 = vmatpush.msra.mxu0 %v451
      %509 = vmatpush.msra.mxu0 %v450
      %510 = vmatpush.msra.mxu0 %v449
      %511 = vmatpush.msra.mxu0 %v448
      %512 = vmatpush.msra.mxu0 %v447
      %513 = vmatpush.msra.mxu0 %v446
      %514 = vmatpush.msra.mxu0 %v445
      %515 = vmatmul.f32.gmra.mxu0 %v494
      %v516 = vpop.f32.mrf.mxu0
      %v517 = vadd.f32 %v487, %v516
      %518 = vmatmul.f32.gmra.mxu0 %v497
      %v519 = vpop.f32.mrf.mxu0
      %v520 = vadd.f32 %v490, %v519
      %521 = vdwg.mxu0
      %s522 = scalar_lea.vmem %s4, 64
      %v523 = vld [vmem:[%s522] sm:$0xff]
      %v524 = vld [vmem:[%s522 + $0x8] sm:$0xff]
      %v525 = vld [vmem:[%s522 + $0x10] sm:$0xff]
      %v526 = vld [vmem:[%s522 + $0x18] sm:$0xff]
      %v527 = vld [vmem:[%s522 + $0x20] sm:$0xff]
      %v528 = vld [vmem:[%s522 + $0x28] sm:$0xff]
      %v529 = vld [vmem:[%s522 + $0x30] sm:$0xff]
      %v530 = vld [vmem:[%s522 + $0x38] sm:$0xff]
      %vm531 = vcmask 1046528
      %v532 = vrot.slane %v443, 1
      %v533 = vrot.slane %v444, 1
      %v534 = vsel %vm531, %v532, %v533
      %v535 = vsel %vm492, %v534, 0
      %v537 = vsel %vm492, %v533, 0
      %539 = vmatpush.msra.mxu0 0.0
      %540 = vmatpush.msra.mxu0 0.0
      %541 = vmatpush.msra.mxu0 0.0
      %542 = vmatpush.msra.mxu0 0.0
      %543 = vmatpush.msra.mxu0 0.0
      %544 = vmatpush.msra.mxu0 0.0
      %545 = vmatpush.msra.mxu0 0.0
      %546 = vmatpush.msra.mxu0 0.0
      %547 = vmatpush.msra.mxu0 %v530
      %548 = vmatpush.msra.mxu0 %v529
      %549 = vmatpush.msra.mxu0 %v528
      %550 = vmatpush.msra.mxu0 %v527
      %551 = vmatpush.msra.mxu0 %v526
      %552 = vmatpush.msra.mxu0 %v525
      %553 = vmatpush.msra.mxu0 %v524
      %554 = vmatpush.msra.mxu0 %v523
      %555 = vmatmul.f32.gmra.mxu0 %v535
      %v556 = vpop.f32.mrf.mxu0
      %v557 = vadd.f32 0.0, %v556
      %558 = vmatmul.f32.gmra.mxu0 %v537
      %v559 = vpop.f32.mrf.mxu0
      %v560 = vadd.f32 0.0, %v559
      %561 = vdwg.mxu0
      %v562 = vadd.f32 %v517, %v557
      %v563 = vadd.f32 %v520, %v560
      %s564 = scalar_lea.vmem %s5, 128
      %v565 = vld [vmem:[%s564] sm:$0xff]
      %v566 = vld [vmem:[%s564 + $0x8] sm:$0xff]
      %v567 = vld [vmem:[%s564 + $0x10] sm:$0xff]
      %v568 = vld [vmem:[%s564 + $0x18] sm:$0xff]
      %v569 = vld [vmem:[%s564 + $0x20] sm:$0xff]
      %v570 = vld [vmem:[%s564 + $0x28] sm:$0xff]
      %v571 = vld [vmem:[%s564 + $0x30] sm:$0xff]
      %v572 = vld [vmem:[%s564 + $0x38] sm:$0xff]
      %v573 = vld [vmem:[%s564 + $0x40] sm:$0xff]
      %v574 = vld [vmem:[%s564 + $0x48] sm:$0xff]
      %v575 = vld [vmem:[%s564 + $0x50] sm:$0xff]
      %v576 = vld [vmem:[%s564 + $0x58] sm:$0xff]
      %v577 = vld [vmem:[%s564 + $0x60] sm:$0xff]
      %v578 = vld [vmem:[%s564 + $0x68] sm:$0xff]
      %v579 = vld [vmem:[%s564 + $0x70] sm:$0xff]
      %v580 = vld [vmem:[%s564 + $0x78] sm:$0xff]
      %v583 = vrot.slane %v441, 1
      %v584 = vrot.slane %v442, 1
      %v585 = vsel %vm531, %v583, %v584
      %588 = vmatpush.msra.mxu0 %v580
      %589 = vmatpush.msra.mxu0 %v579
      %590 = vmatpush.msra.mxu0 %v578
      %591 = vmatpush.msra.mxu0 %v577
      %592 = vmatpush.msra.mxu0 %v576
      %593 = vmatpush.msra.mxu0 %v575
      %594 = vmatpush.msra.mxu0 %v574
      %595 = vmatpush.msra.mxu0 %v573
      %596 = vmatpush.msra.mxu0 %v572
      %597 = vmatpush.msra.mxu0 %v571
      %598 = vmatpush.msra.mxu0 %v570
      %599 = vmatpush.msra.mxu0 %v569
      %600 = vmatpush.msra.mxu0 %v568
      %601 = vmatpush.msra.mxu0 %v567
      %602 = vmatpush.msra.mxu0 %v566
      %603 = vmatpush.msra.mxu0 %v565
      %604 = vmatmul.f32.gmra.mxu0 %v585
      %v605 = vpop.f32.mrf.mxu0
      %v606 = vadd.f32 0.0, %v605
      %607 = vmatmul.f32.gmra.mxu0 %v584
      %v608 = vpop.f32.mrf.mxu0
      %v609 = vadd.f32 0.0, %v608
      %610 = vdwg.mxu0
      %v611 = vadd.f32 %v562, %v606
      %v612 = vadd.f32 %v563, %v609
      %s613 = scalar_lea.vmem %s4, 128
      %v614 = vld [vmem:[%s613] sm:$0xff]
      %v615 = vld [vmem:[%s613 + $0x8] sm:$0xff]
      %v616 = vld [vmem:[%s613 + $0x10] sm:$0xff]
      %v617 = vld [vmem:[%s613 + $0x18] sm:$0xff]
      %v618 = vld [vmem:[%s613 + $0x20] sm:$0xff]
      %v619 = vld [vmem:[%s613 + $0x28] sm:$0xff]
      %v620 = vld [vmem:[%s613 + $0x30] sm:$0xff]
      %v621 = vld [vmem:[%s613 + $0x38] sm:$0xff]
      %vm622 = vcmask 1045504
      %v623 = vrot.slane %v443, 2
      %v624 = vrot.slane %v444, 2
      %v625 = vsel %vm622, %v623, %v624
      %v626 = vsel %vm492, %v625, 0
      %v628 = vsel %vm492, %v624, 0
      %630 = vmatpush.msra.mxu0 0.0
      %631 = vmatpush.msra.mxu0 0.0
      %632 = vmatpush.msra.mxu0 0.0
      %633 = vmatpush.msra.mxu0 0.0
      %634 = vmatpush.msra.mxu0 0.0
      %635 = vmatpush.msra.mxu0 0.0
      %636 = vmatpush.msra.mxu0 0.0
      %637 = vmatpush.msra.mxu0 0.0
      %638 = vmatpush.msra.mxu0 %v621
      %639 = vmatpush.msra.mxu0 %v620
      %640 = vmatpush.msra.mxu0 %v619
      %641 = vmatpush.msra.mxu0 %v618
      %642 = vmatpush.msra.mxu0 %v617
      %643 = vmatpush.msra.mxu0 %v616
      %644 = vmatpush.msra.mxu0 %v615
      %645 = vmatpush.msra.mxu0 %v614
      %646 = vmatmul.f32.gmra.mxu0 %v626
      %v647 = vpop.f32.mrf.mxu0
      %v648 = vadd.f32 0.0, %v647
      %649 = vmatmul.f32.gmra.mxu0 %v628
      %v650 = vpop.f32.mrf.mxu0
      %v651 = vadd.f32 0.0, %v650
      %652 = vdwg.mxu0
      %v653 = vadd.f32 %v611, %v648
      %v654 = vadd.f32 %v612, %v651
      %s655 = scalar_lea.vmem %s5, 256
      %v656 = vld [vmem:[%s655] sm:$0xff]
      %v657 = vld [vmem:[%s655 + $0x8] sm:$0xff]
      %v658 = vld [vmem:[%s655 + $0x10] sm:$0xff]
      %v659 = vld [vmem:[%s655 + $0x18] sm:$0xff]
      %v660 = vld [vmem:[%s655 + $0x20] sm:$0xff]
      %v661 = vld [vmem:[%s655 + $0x28] sm:$0xff]
      %v662 = vld [vmem:[%s655 + $0x30] sm:$0xff]
      %v663 = vld [vmem:[%s655 + $0x38] sm:$0xff]
      %v664 = vld [vmem:[%s655 + $0x40] sm:$0xff]
      %v665 = vld [vmem:[%s655 + $0x48] sm:$0xff]
      %v666 = vld [vmem:[%s655 + $0x50] sm:$0xff]
      %v667 = vld [vmem:[%s655 + $0x58] sm:$0xff]
      %v668 = vld [vmem:[%s655 + $0x60] sm:$0xff]
      %v669 = vld [vmem:[%s655 + $0x68] sm:$0xff]
      %v670 = vld [vmem:[%s655 + $0x70] sm:$0xff]
      %v671 = vld [vmem:[%s655 + $0x78] sm:$0xff]
      %v672 = vrot.slane %v441, 2
      %v673 = vrot.slane %v442, 2
      %v674 = vsel %vm622, %v672, %v673
      %677 = vmatpush.msra.mxu0 %v671
      %678 = vmatpush.msra.mxu0 %v670
      %679 = vmatpush.msra.mxu0 %v669
      %680 = vmatpush.msra.mxu0 %v668
      %681 = vmatpush.msra.mxu0 %v667
      %682 = vmatpush.msra.mxu0 %v666
      %683 = vmatpush.msra.mxu0 %v665
      %684 = vmatpush.msra.mxu0 %v664
      %685 = vmatpush.msra.mxu0 %v663
      %686 = vmatpush.msra.mxu0 %v662
      %687 = vmatpush.msra.mxu0 %v661
      %688 = vmatpush.msra.mxu0 %v660
      %689 = vmatpush.msra.mxu0 %v659
      %690 = vmatpush.msra.mxu0 %v658
      %691 = vmatpush.msra.mxu0 %v657
      %692 = vmatpush.msra.mxu0 %v656
      %693 = vmatmul.f32.gmra.mxu0 %v674
      %v694 = vpop.f32.mrf.mxu0
      %v695 = vadd.f32 0.0, %v694
      %696 = vmatmul.f32.gmra.mxu0 %v673
      %v697 = vpop.f32.mrf.mxu0
      %v698 = vadd.f32 0.0, %v697
      %699 = vdwg.mxu0
      %v700 = vadd.f32 %v653, %v695
      %v701 = vadd.f32 %v654, %v698
      %v702 = vld [vmem:[%s6] sm:$0x1]
      %v704 = vperm.slane %v702, 0
      %v706 = vadd.f32 %v700, %v704
      %v707 = vadd.f32 %v701, %v704
      %v708 = vmax.f32 %v706, 0.0
      %v709 = vmax.f32 %v707, 0.0
      %v710 = vld [vmem:[%s7] sm:$0xff]
      %v711 = vld [vmem:[%s7 + $0x8] sm:$0xff]
      %v712 = vld [vmem:[%s7 + $0x10] sm:$0xff]
      %v713 = vld [vmem:[%s7 + $0x18] sm:$0xff]
      %v714 = vld [vmem:[%s7 + $0x20] sm:$0xff]
      %v715 = vld [vmem:[%s7 + $0x28] sm:$0xff]
      %v716 = vld [vmem:[%s7 + $0x30] sm:$0xff]
      %v717 = vld [vmem:[%s8] sm:$0x1]
      %v719 = vperm.slane %v717, 0
      %vm721 = vcmask 457728
      %v723 = vsel %vm721, %v708, 0
      %v726 = vsel %vm721, %v709, 0
      %728 = vmatpush.msra.mxu0 0.0
      %729 = vmatpush.msra.mxu0 0.0
      %730 = vmatpush.msra.mxu0 0.0
      %731 = vmatpush.msra.mxu0 0.0
      %732 = vmatpush.msra.mxu0 0.0
      %733 = vmatpush.msra.mxu0 0.0
      %734 = vmatpush.msra.mxu0 0.0
      %735 = vmatpush.msra.mxu0 0.0
      %736 = vmatpush.msra.mxu0 0.0
      %737 = vmatpush.msra.mxu0 %v716
      %738 = vmatpush.msra.mxu0 %v715
      %739 = vmatpush.msra.mxu0 %v714
      %740 = vmatpush.msra.mxu0 %v713
      %741 = vmatpush.msra.mxu0 %v712
      %742 = vmatpush.msra.mxu0 %v711
      %743 = vmatpush.msra.mxu0 %v710
      %744 = vmatmul.f32.gmra.mxu0 %v723
      %v745 = vpop.f32.mrf.mxu0
      %v746 = vadd.f32 %v719, %v745
      %747 = vmatmul.f32.gmra.mxu0 %v726
      %v748 = vpop.f32.mrf.mxu0
      %v749 = vadd.f32 %v719, %v748
      %750 = vdwg.mxu0
      %v751 = vmax.f32 %v746, 0.0
      %v752 = vmax.f32 %v749, 0.0
      %753 = vst.msk [vmem:[%s352] sm:$0xff] %vm721, %v751
      %vm754 = vcmask 455680
      %755 = vst.msk [vmem:[%s352 + $0x8] sm:$0x3f] %vm754, %v752
      %p756 = scmp.lt.s32.totalorder %s20, 1
      %s757 = scalar_select %p756, %s20, 1
      %s758 = smul.addr %s757, 2
      %s759 = smul.addr %s758, 8
      %s760 = scalar_lea.vmem %s9, %s759
      // Predicated region
      $region57: #{res_block.3} parent=55 // pred_check
        %p761 = pneg %p237
      $region58: #{res_block.3} parent=55 // pred_check_branch
        %763 = sbr.rel (%p761) target = $region60
      $region59: #{res_block.3} parent=55 // pred_region
        _
      $region60: #{res_block.3} parent=55 // pred_fallthru
        _
    $region56: #{res_block.3} parent=5 // pred_fallthru
      _
    %p764 = scmp.le.s32.totalorder 2, %s15
    // Predicated region
    $region61: #{res_block.3} parent=5 // pred_check
      %p765 = pneg %p764
    $region62: #{res_block.3} parent=5 // pred_check_branch
      %767 = sbr.rel (%p765) target = $region64
    $region63: #{res_block.3} parent=5 // pred_region
      %s768 = ssub.s32 %s15, 2
      // Predicated region
      $region65: #{res_block.3} parent=63 // pred_check
        %p769 = pneg %p243
      $region66: #{res_block.3} parent=63 // pred_check_branch
        %771 = sbr.rel (%p769) target = $region68
      $region67: #{res_block.3} parent=63 // pred_region
        %p772 = scmp.lt.s32.totalorder %s21, 1
        %s773 = scalar_select %p772, %s21, 1
        %s774 = smul.addr %s773, 2
        %s775 = smul.addr %s774, 8
        %s776 = scalar_lea.vmem %s9, %s775
      $region68: #{res_block.3} parent=63 // pred_fallthru
        _
    $region64: #{res_block.3} parent=5 // pred_fallthru
      _
  $region6: #{res_block.3} parent=0 // loop_footer
    %s19 = sadd.s32 1, %s15
  $region7: #{res_block.3} parent=0 // loop_footer_branch
    %14 = sbr.rel target = $region3
  $region8: #{res_block.3} parent=0 // loop_exit
    _

</llo_original>
